<compile_context>
chip_gen: v5e
topology: v5e:2x2
jax: 0.10.0
libtpu: 0.0.40
codegen_flags: <defaults>
</compile_context>

<pallas_src>
import functools

import numpy as np
import jax
import jax.numpy as jnp
from jax import lax
from jax.experimental import pallas as pl
from jax.experimental.pallas import tpu as pltpu


def _round_up(a, b):
    return (a + b - 1) // b * b


def _gather_kernel(idx_ref, w_ref, slab_ref, out_ref, *, groups_per_tile, C):
    """One grid step processes groups_per_tile * 8 points.

    idx_ref : (4*N_pad,) int32 SMEM (scalar prefetch), layout idx[4*n + corner]
    w_ref   : (groups_per_tile, 8, 4) f32 VMEM  — bilinear corner weights
    slab_ref: (BHW_pad//8, 8, C) f32 VMEM       — resident NHWC feature slab
    out_ref : (groups_per_tile, 8, C) f32 VMEM
    """
    tile_base = pl.program_id(0) * (groups_per_tile * 8)
    iota8 = lax.broadcasted_iota(jnp.int32, (8, C), 0)   # sublane id, hoisted

    def per_group(g, carry):
        wblk = w_ref[g]                                   # (8, 4)
        acc = jnp.zeros((8, C), jnp.float32)
        for c in range(4):                                # static: 4 corners
            gathered = jnp.zeros((8, C), jnp.float32)
            for j in range(8):                            # static: 8 points / group
                flat = idx_ref[(tile_base + g * 8 + j) * 4 + c]   # SMEM scalar
                grp = flat >> 3                           # slab sublane-group
                r = flat & 7                              # row within the group
                block = slab_ref[grp]                     # (8, C), leading-axis dyn idx
                # select row r of the group, then place it at sublane j
                row = jnp.sum(jnp.where(iota8 == r, block, 0.0),
                              axis=0, keepdims=True)      # (1, C)
                gathered = gathered + jnp.where(iota8 == j, row, 0.0)
            acc = acc + wblk[:, c:c + 1] * gathered
        out_ref[g] = acc
        return carry

    lax.fori_loop(0, groups_per_tile, per_group, 0)


def extract_query_features(x, coords, extraction_method='ROIPooling',
                           spatial_scale=1.0, points_per_tile=256):
    """x: (B, C, H, W) NCHW; coords: (B, P, 2) as (y, x). Returns (B*P, C)."""
    B, C, H, W = x.shape
    Bc, P, _ = coords.shape
    N = Bc * P
    HW = H * W
    BHW = B * HW

    # ---- O(N) index / weight setup (plain jnp; fused by XLA, no extra kernel) ----
    cf = coords.reshape(N, 2).astype(jnp.float32)
    yc = cf[:, 0]
    xc = cf[:, 1]
    scale = jnp.float32(spatial_scale)
    if extraction_method == 'ROIAlign':
        xc = xc - 0.5 / scale
        yc = yc - 0.5 / scale
    # batch index exactly as the module builds it: arange(B) tiled P times -> n % B
    bi = jnp.arange(N, dtype=jnp.int32) % Bc

    sx = xc * scale + 0.5
    sy = yc * scale + 0.5
    valid = (sy >= -1.0) & (sy <= H) & (sx >= -1.0) & (sx <= W)
    sy = jnp.maximum(sy, 0.0)
    sx = jnp.maximum(sx, 0.0)
    yl0 = jnp.floor(sy).astype(jnp.int32)
    xl0 = jnp.floor(sx).astype(jnp.int32)
    clamp_y = yl0 >= H - 1
    clamp_x = xl0 >= W - 1
    y_low = jnp.where(clamp_y, H - 1, yl0)
    y_high = jnp.where(clamp_y, H - 1, yl0 + 1)
    x_low = jnp.where(clamp_x, W - 1, xl0)
    x_high = jnp.where(clamp_x, W - 1, xl0 + 1)
    sy = jnp.where(clamp_y, y_low.astype(jnp.float32), sy)
    sx = jnp.where(clamp_x, x_low.astype(jnp.float32), sx)
    ly = sy - y_low.astype(jnp.float32)
    lx = sx - x_low.astype(jnp.float32)
    hy = 1.0 - ly
    hx = 1.0 - lx
    vm = valid.astype(jnp.float32)

    base = bi * HW
    idx = jnp.stack([base + y_low * W + x_low,
                     base + y_low * W + x_high,
                     base + y_high * W + x_low,
                     base + y_high * W + x_high], axis=1).astype(jnp.int32)  # (N, 4)
    wts = jnp.stack([hy * hx, hy * lx, ly * hx, ly * lx], axis=1) * vm[:, None]

    # ---- tiling / padding of the point axis ----
    TN = _round_up(min(int(points_per_tile), _round_up(N, 8)), 8)
    N_pad = _round_up(N, TN)
    TNg = TN // 8
    num_tiles = N_pad // TN
    pad_n = N_pad - N
    if pad_n:
        idx = jnp.pad(idx, ((0, pad_n), (0, 0)))     # index 0 with zero weight
        wts = jnp.pad(wts, ((0, pad_n), (0, 0)))
    idx_flat = idx.reshape(-1)                        # (4*N_pad,), 1-D -> no SMEM row pad
    wts_g = wts.reshape(N_pad // 8, 8, 4)

    # ---- feature slab: NCHW -> NHWC (BHW, C), grouped by sublane ----
    # TODO(synk): the NCHW->NHWC transpose is one extra HBM pass over the feature
    # map; ideally the producer emits NHWC (or the slab is kept in bf16 to halve
    # the traffic and resident VMEM).
    xf = jnp.transpose(x, (0, 2, 3, 1)).reshape(BHW, C).astype(jnp.float32)
    BHW_pad = _round_up(BHW, 8)
    if BHW_pad != BHW:
        xf = jnp.pad(xf, ((0, BHW_pad - BHW), (0, 0)))
    G = BHW_pad // 8
    slab = xf.reshape(G, 8, C)

    # ---- explicit VMEM budget (resident slab + double-buffered tiles) ----
    lane_c = _round_up(C, 128)
    slab_bytes = G * 8 * lane_c * 4 * 2               # conservative 2-buffer count
    tile_bytes = TNg * 8 * (lane_c + 128) * 4 * 2
    need = slab_bytes + tile_bytes + (1 << 20)
    # TODO(synk): if `need` exceeds per-core VMEM (64 MiB on v7x, 128 MiB on
    # v5e/v6e) switch to a manual double-buffered DMA-gather over an HBM slab
    # instead of the resident-slab path.
    vmem_limit = int(min(max(need, 32 * 1024 * 1024), 128 * 1024 * 1024))

    kernel = functools.partial(_gather_kernel, groups_per_tile=TNg, C=C)

    grid_spec = pltpu.PrefetchScalarGridSpec(
        num_scalar_prefetch=1,                                    # idx_flat -> SMEM
        grid=(num_tiles,),
        in_specs=[
            pl.BlockSpec((TNg, 8, 4), lambda t, idx_r: (t, 0, 0)),   # weights tile
            pl.BlockSpec((G, 8, C), lambda t, idx_r: (0, 0, 0)),     # resident slab
        ],
        out_specs=pl.BlockSpec((TNg, 8, C), lambda t, idx_r: (t, 0, 0)),
    )

    cost = pl.CostEstimate(
        flops=int(80 * N_pad * C),
        transcendentals=0,
        bytes_accessed=int(4 * (G * 8 * C + N_pad * C + 8 * N_pad)),
    )

    out = pl.pallas_call(
        kernel,
        out_shape=jax.ShapeDtypeStruct((N_pad // 8, 8, C), jnp.float32),
        grid_spec=grid_spec,
        compiler_params=pltpu.CompilerParams(
            dimension_semantics=("parallel",),                    # megacore on v7x
            vmem_limit_bytes=vmem_limit),
        cost_estimate=cost,
    )(idx_flat, wts_g, slab)

    return out.reshape(N_pad, C)[:N]


def _ref_extract(x, coords, extraction_method='ROIPooling', spatial_scale=1.0):
    """Plain numpy reference following torchvision roi_align bilinear_interpolate."""
    B, C, H, W = x.shape
    Bc, P, _ = coords.shape
    N = Bc * P
    cf = coords.reshape(N, 2).astype(np.float64)
    out = np.zeros((N, C), dtype=np.float64)
    for n in range(N):
        y0, x0 = cf[n, 0], cf[n, 1]
        if extraction_method == 'ROIAlign':
            x0 -= 0.5 / spatial_scale
            y0 -= 0.5 / spatial_scale
        b = n % Bc
        sx = x0 * spatial_scale + 0.5
        sy = y0 * spatial_scale + 0.5
        if sy < -1.0 or sy > H or sx < -1.0 or sx > W:
            continue
        sy = max(sy, 0.0)
        sx = max(sx, 0.0)
        yl = int(np.floor(sy))
        xl = int(np.floor(sx))
        if yl >= H - 1:
            yh = yl = H - 1
            sy = float(yl)
        else:
            yh = yl + 1
        if xl >= W - 1:
            xh = xl = W - 1
            sx = float(xl)
        else:
            xh = xl + 1
        ly, lx = sy - yl, sx - xl
        hy, hx = 1.0 - ly, 1.0 - lx
        out[n] = (hy * hx * x[b, :, yl, xl] + hy * lx * x[b, :, yl, xh]
                  + ly * hx * x[b, :, yh, xl] + ly * lx * x[b, :, yh, xh])
    return out


if __name__ == "__main__":
    # NOTE: the module has no trainable parameters; nothing to initialize.
    key = jax.random.PRNGKey(0)
    k1, k2 = jax.random.split(key)

    B, C, H, W, P = 2, 4, 16, 16, 8
    x = jax.random.normal(k1, (B, C, H, W), dtype=jnp.float32)
    coords = jax.random.uniform(k2, (B, P, 2), dtype=jnp.float32,
                                minval=0.0, maxval=float(H) - 1.0)

    for method in ('ROIPooling', 'ROIAlign'):
        out = extract_query_features(x, coords, extraction_method=method,
                                     spatial_scale=1.0)
        out = jax.block_until_ready(out)
        ref = _ref_extract(np.asarray(x), np.asarray(coords),
                           extraction_method=method, spatial_scale=1.0)
        assert out.shape == (B * P, C), out.shape
        err = np.max(np.abs(np.asarray(out) - ref))
        assert np.allclose(np.asarray(out), ref, atol=1e-3, rtol=1e-3), (method, err)

    print("KERNEL_OK")
</pallas_src>

<mosaic_0001>
module attributes {stable_mosaic.version = 11 : i64} {
  func.func @_gather_kernel(%arg0: i32, %arg1: memref<64xi32, #tpu.memory_space<smem>>, %arg2: memref<2x8x4xf32, #tpu.memory_space<vmem>>, %arg3: memref<64x8x4xf32, #tpu.memory_space<vmem>>, %arg4: memref<2x8x4xf32, #tpu.memory_space<vmem>>) attributes {dimension_semantics = [#tpu.dimension_semantics<parallel>], iteration_bounds = array<i64: 1>, scalar_prefetch = 1 : i64, scratch_operands = 0 : i64, tpu.core_type = #tpu.core_type<tc>, window_params = [{transform_indices = @transform_0, window_bounds = array<i64: 2, 8, 4>}, {pipeline_mode = #tpu.pipeline_mode<synchronous>, transform_indices = @transform_1, window_bounds = array<i64: 64, 8, 4>}, {transform_indices = @transform_2, window_bounds = array<i64: 2, 8, 4>}]} {
    %c16_i32 = arith.constant 16 : i32
    %0 = arith.muli %arg0, %c16_i32 : i32
    %1 = tpu.iota {dimensions = array<i32: 0>} : vector<8x4xi32>
    %c0_i32 = arith.constant 0 : i32
    %c2_i32 = arith.constant 2 : i32
    %2 = arith.addi %c0_i32, %c2_i32 : i32
    %c1_i32 = arith.constant 1 : i32
    scf.for %arg5 = %c0_i32 to %2 step %c1_i32  : i32 {
      %3 = arith.index_cast %arg5 : i32 to index
      %c0 = arith.constant 0 : index
      %c0_1 = arith.constant 0 : index
      %4 = vector.load %arg2[%3, %c0, %c0_1] : memref<2x8x4xf32, #tpu.memory_space<vmem>>, vector<1x8x4xf32>
      %5 = vector.shape_cast %4 : vector<1x8x4xf32> to vector<8x4xf32>
      %cst = arith.constant 0.000000e+00 : f32
      %6 = vector.broadcast %cst : f32 to vector<8x4xf32>
      %cst_2 = arith.constant 0.000000e+00 : f32
      %7 = vector.broadcast %cst_2 : f32 to vector<8x4xf32>
      %c8_i32 = arith.constant 8 : i32
      %8 = arith.muli %arg5, %c8_i32 : i32
      %9 = arith.addi %0, %8 : i32
      %c0_i32_3 = arith.constant 0 : i32
      %10 = arith.addi %9, %c0_i32_3 : i32
      %c4_i32 = arith.constant 4 : i32
      %11 = arith.muli %10, %c4_i32 : i32
      %c0_i32_4 = arith.constant 0 : i32
      %12 = arith.addi %11, %c0_i32_4 : i32
      %13 = arith.index_cast %12 : i32 to index
      %14 = memref.load %arg1[%13] : memref<64xi32, #tpu.memory_space<smem>>
      %c3_i32 = arith.constant 3 : i32
      %15 = arith.shrsi %14, %c3_i32 : i32
      %c7_i32 = arith.constant 7 : i32
      %16 = arith.andi %14, %c7_i32 : i32
      %17 = arith.index_cast %15 : i32 to index
      %c0_5 = arith.constant 0 : index
      %c0_6 = arith.constant 0 : index
      %18 = vector.load %arg3[%17, %c0_5, %c0_6] : memref<64x8x4xf32, #tpu.memory_space<vmem>>, vector<1x8x4xf32>
      %19 = vector.shape_cast %18 : vector<1x8x4xf32> to vector<8x4xf32>
      %20 = vector.broadcast %16 : i32 to vector<8x4xi32>
      %21 = arith.cmpi eq, %1, %20 : vector<8x4xi32>
      %cst_7 = arith.constant 0.000000e+00 : f32
      %22 = vector.broadcast %cst_7 : f32 to vector<8x4xf32>
      %23 = arith.select %21, %19, %22 : vector<8x4xi1>, vector<8x4xf32>
      %cst_8 = arith.constant dense<0.000000e+00> : vector<4xf32>
      %24 = vector.multi_reduction <add>, %23, %cst_8 [0] : vector<8x4xf32> to vector<4xf32>
      %25 = vector.shape_cast %24 : vector<4xf32> to vector<1x4xf32>
      %c0_i32_9 = arith.constant 0 : i32
      %26 = vector.broadcast %c0_i32_9 : i32 to vector<8x4xi32>
      %27 = arith.cmpi eq, %1, %26 : vector<8x4xi32>
      %cst_10 = arith.constant 0.000000e+00 : f32
      %28 = vector.shape_cast %25 : vector<1x4xf32> to vector<1x4xf32>
      %29 = vector.broadcast %28 : vector<1x4xf32> to vector<8x4xf32>
      %30 = vector.broadcast %cst_10 : f32 to vector<8x4xf32>
      %31 = arith.select %27, %29, %30 : vector<8x4xi1>, vector<8x4xf32>
      %32 = arith.addf %7, %31 : vector<8x4xf32>
      %c8_i32_11 = arith.constant 8 : i32
      %33 = arith.muli %arg5, %c8_i32_11 : i32
      %34 = arith.addi %0, %33 : i32
      %c1_i32_12 = arith.constant 1 : i32
      %35 = arith.addi %34, %c1_i32_12 : i32
      %c4_i32_13 = arith.constant 4 : i32
      %36 = arith.muli %35, %c4_i32_13 : i32
      %c0_i32_14 = arith.constant 0 : i32
      %37 = arith.addi %36, %c0_i32_14 : i32
      %38 = arith.index_cast %37 : i32 to index
      %39 = memref.load %arg1[%38] : memref<64xi32, #tpu.memory_space<smem>>
      %c3_i32_15 = arith.constant 3 : i32
      %40 = arith.shrsi %39, %c3_i32_15 : i32
      %c7_i32_16 = arith.constant 7 : i32
      %41 = arith.andi %39, %c7_i32_16 : i32
      %42 = arith.index_cast %40 : i32 to index
      %c0_17 = arith.constant 0 : index
      %c0_18 = arith.constant 0 : index
      %43 = vector.load %arg3[%42, %c0_17, %c0_18] : memref<64x8x4xf32, #tpu.memory_space<vmem>>, vector<1x8x4xf32>
      %44 = vector.shape_cast %43 : vector<1x8x4xf32> to vector<8x4xf32>
      %45 = vector.broadcast %41 : i32 to vector<8x4xi32>
      %46 = arith.cmpi eq, %1, %45 : vector<8x4xi32>
      %cst_19 = arith.constant 0.000000e+00 : f32
      %47 = vector.broadcast %cst_19 : f32 to vector<8x4xf32>
      %48 = arith.select %46, %44, %47 : vector<8x4xi1>, vector<8x4xf32>
      %cst_20 = arith.constant dense<0.000000e+00> : vector<4xf32>
      %49 = vector.multi_reduction <add>, %48, %cst_20 [0] : vector<8x4xf32> to vector<4xf32>
      %50 = vector.shape_cast %49 : vector<4xf32> to vector<1x4xf32>
      %c1_i32_21 = arith.constant 1 : i32
      %51 = vector.broadcast %c1_i32_21 : i32 to vector<8x4xi32>
      %52 = arith.cmpi eq, %1, %51 : vector<8x4xi32>
      %cst_22 = arith.constant 0.000000e+00 : f32
      %53 = vector.shape_cast %50 : vector<1x4xf32> to vector<1x4xf32>
      %54 = vector.broadcast %53 : vector<1x4xf32> to vector<8x4xf32>
      %55 = vector.broadcast %cst_22 : f32 to vector<8x4xf32>
      %56 = arith.select %52, %54, %55 : vector<8x4xi1>, vector<8x4xf32>
      %57 = arith.addf %32, %56 : vector<8x4xf32>
      %c8_i32_23 = arith.constant 8 : i32
      %58 = arith.muli %arg5, %c8_i32_23 : i32
      %59 = arith.addi %0, %58 : i32
      %c2_i32_24 = arith.constant 2 : i32
      %60 = arith.addi %59, %c2_i32_24 : i32
      %c4_i32_25 = arith.constant 4 : i32
      %61 = arith.muli %60, %c4_i32_25 : i32
      %c0_i32_26 = arith.constant 0 : i32
      %62 = arith.addi %61, %c0_i32_26 : i32
      %63 = arith.index_cast %62 : i32 to index
      %64 = memref.load %arg1[%63] : memref<64xi32, #tpu.memory_space<smem>>
      %c3_i32_27 = arith.constant 3 : i32
      %65 = arith.shrsi %64, %c3_i32_27 : i32
      %c7_i32_28 = arith.constant 7 : i32
      %66 = arith.andi %64, %c7_i32_28 : i32
      %67 = arith.index_cast %65 : i32 to index
      %c0_29 = arith.constant 0 : index
      %c0_30 = arith.constant 0 : index
      %68 = vector.load %arg3[%67, %c0_29, %c0_30] : memref<64x8x4xf32, #tpu.memory_space<vmem>>, vector<1x8x4xf32>
      %69 = vector.shape_cast %68 : vector<1x8x4xf32> to vector<8x4xf32>
      %70 = vector.broadcast %66 : i32 to vector<8x4xi32>
      %71 = arith.cmpi eq, %1, %70 : vector<8x4xi32>
      %cst_31 = arith.constant 0.000000e+00 : f32
      %72 = vector.broadcast %cst_31 : f32 to vector<8x4xf32>
      %73 = arith.select %71, %69, %72 : vector<8x4xi1>, vector<8x4xf32>
      %cst_32 = arith.constant dense<0.000000e+00> : vector<4xf32>
      %74 = vector.multi_reduction <add>, %73, %cst_32 [0] : vector<8x4xf32> to vector<4xf32>
      %75 = vector.shape_cast %74 : vector<4xf32> to vector<1x4xf32>
      %c2_i32_33 = arith.constant 2 : i32
      %76 = vector.broadcast %c2_i32_33 : i32 to vector<8x4xi32>
      %77 = arith.cmpi eq, %1, %76 : vector<8x4xi32>
      %cst_34 = arith.constant 0.000000e+00 : f32
      %78 = vector.shape_cast %75 : vector<1x4xf32> to vector<1x4xf32>
      %79 = vector.broadcast %78 : vector<1x4xf32> to vector<8x4xf32>
      %80 = vector.broadcast %cst_34 : f32 to vector<8x4xf32>
      %81 = arith.select %77, %79, %80 : vector<8x4xi1>, vector<8x4xf32>
      %82 = arith.addf %57, %81 : vector<8x4xf32>
      %c8_i32_35 = arith.constant 8 : i32
      %83 = arith.muli %arg5, %c8_i32_35 : i32
      %84 = arith.addi %0, %83 : i32
      %c3_i32_36 = arith.constant 3 : i32
      %85 = arith.addi %84, %c3_i32_36 : i32
      %c4_i32_37 = arith.constant 4 : i32
      %86 = arith.muli %85, %c4_i32_37 : i32
      %c0_i32_38 = arith.constant 0 : i32
      %87 = arith.addi %86, %c0_i32_38 : i32
      %88 = arith.index_cast %87 : i32 to index
      %89 = memref.load %arg1[%88] : memref<64xi32, #tpu.memory_space<smem>>
      %c3_i32_39 = arith.constant 3 : i32
      %90 = arith.shrsi %89, %c3_i32_39 : i32
      %c7_i32_40 = arith.constant 7 : i32
      %91 = arith.andi %89, %c7_i32_40 : i32
      %92 = arith.index_cast %90 : i32 to index
      %c0_41 = arith.constant 0 : index
      %c0_42 = arith.constant 0 : index
      %93 = vector.load %arg3[%92, %c0_41, %c0_42] : memref<64x8x4xf32, #tpu.memory_space<vmem>>, vector<1x8x4xf32>
      %94 = vector.shape_cast %93 : vector<1x8x4xf32> to vector<8x4xf32>
      %95 = vector.broadcast %91 : i32 to vector<8x4xi32>
      %96 = arith.cmpi eq, %1, %95 : vector<8x4xi32>
      %cst_43 = arith.constant 0.000000e+00 : f32
      %97 = vector.broadcast %cst_43 : f32 to vector<8x4xf32>
      %98 = arith.select %96, %94, %97 : vector<8x4xi1>, vector<8x4xf32>
      %cst_44 = arith.constant dense<0.000000e+00> : vector<4xf32>
      %99 = vector.multi_reduction <add>, %98, %cst_44 [0] : vector<8x4xf32> to vector<4xf32>
      %100 = vector.shape_cast %99 : vector<4xf32> to vector<1x4xf32>
      %c3_i32_45 = arith.constant 3 : i32
      %101 = vector.broadcast %c3_i32_45 : i32 to vector<8x4xi32>
      %102 = arith.cmpi eq, %1, %101 : vector<8x4xi32>
      %cst_46 = arith.constant 0.000000e+00 : f32
      %103 = vector.shape_cast %100 : vector<1x4xf32> to vector<1x4xf32>
      %104 = vector.broadcast %103 : vector<1x4xf32> to vector<8x4xf32>
      %105 = vector.broadcast %cst_46 : f32 to vector<8x4xf32>
      %106 = arith.select %102, %104, %105 : vector<8x4xi1>, vector<8x4xf32>
      %107 = arith.addf %82, %106 : vector<8x4xf32>
      %c8_i32_47 = arith.constant 8 : i32
      %108 = arith.muli %arg5, %c8_i32_47 : i32
      %109 = arith.addi %0, %108 : i32
      %c4_i32_48 = arith.constant 4 : i32
      %110 = arith.addi %109, %c4_i32_48 : i32
      %c4_i32_49 = arith.constant 4 : i32
      %111 = arith.muli %110, %c4_i32_49 : i32
      %c0_i32_50 = arith.constant 0 : i32
      %112 = arith.addi %111, %c0_i32_50 : i32
      %113 = arith.index_cast %112 : i32 to index
      %114 = memref.load %arg1[%113] : memref<64xi32, #tpu.memory_space<smem>>
      %c3_i32_51 = arith.constant 3 : i32
      %115 = arith.shrsi %114, %c3_i32_51 : i32
      %c7_i32_52 = arith.constant 7 : i32
      %116 = arith.andi %114, %c7_i32_52 : i32
      %117 = arith.index_cast %115 : i32 to index
      %c0_53 = arith.constant 0 : index
      %c0_54 = arith.constant 0 : index
      %118 = vector.load %arg3[%117, %c0_53, %c0_54] : memref<64x8x4xf32, #tpu.memory_space<vmem>>, vector<1x8x4xf32>
      %119 = vector.shape_cast %118 : vector<1x8x4xf32> to vector<8x4xf32>
      %120 = vector.broadcast %116 : i32 to vector<8x4xi32>
      %121 = arith.cmpi eq, %1, %120 : vector<8x4xi32>
      %cst_55 = arith.constant 0.000000e+00 : f32
      %122 = vector.broadcast %cst_55 : f32 to vector<8x4xf32>
      %123 = arith.select %121, %119, %122 : vector<8x4xi1>, vector<8x4xf32>
      %cst_56 = arith.constant dense<0.000000e+00> : vector<4xf32>
      %124 = vector.multi_reduction <add>, %123, %cst_56 [0] : vector<8x4xf32> to vector<4xf32>
      %125 = vector.shape_cast %124 : vector<4xf32> to vector<1x4xf32>
      %c4_i32_57 = arith.constant 4 : i32
      %126 = vector.broadcast %c4_i32_57 : i32 to vector<8x4xi32>
      %127 = arith.cmpi eq, %1, %126 : vector<8x4xi32>
      %cst_58 = arith.constant 0.000000e+00 : f32
      %128 = vector.shape_cast %125 : vector<1x4xf32> to vector<1x4xf32>
      %129 = vector.broadcast %128 : vector<1x4xf32> to vector<8x4xf32>
      %130 = vector.broadcast %cst_58 : f32 to vector<8x4xf32>
      %131 = arith.select %127, %129, %130 : vector<8x4xi1>, vector<8x4xf32>
      %132 = arith.addf %107, %131 : vector<8x4xf32>
      %c8_i32_59 = arith.constant 8 : i32
      %133 = arith.muli %arg5, %c8_i32_59 : i32
      %134 = arith.addi %0, %133 : i32
      %c5_i32 = arith.constant 5 : i32
      %135 = arith.addi %134, %c5_i32 : i32
      %c4_i32_60 = arith.constant 4 : i32
      %136 = arith.muli %135, %c4_i32_60 : i32
      %c0_i32_61 = arith.constant 0 : i32
      %137 = arith.addi %136, %c0_i32_61 : i32
      %138 = arith.index_cast %137 : i32 to index
      %139 = memref.load %arg1[%138] : memref<64xi32, #tpu.memory_space<smem>>
      %c3_i32_62 = arith.constant 3 : i32
      %140 = arith.shrsi %139, %c3_i32_62 : i32
      %c7_i32_63 = arith.constant 7 : i32
      %141 = arith.andi %139, %c7_i32_63 : i32
      %142 = arith.index_cast %140 : i32 to index
      %c0_64 = arith.constant 0 : index
      %c0_65 = arith.constant 0 : index
      %143 = vector.load %arg3[%142, %c0_64, %c0_65] : memref<64x8x4xf32, #tpu.memory_space<vmem>>, vector<1x8x4xf32>
      %144 = vector.shape_cast %143 : vector<1x8x4xf32> to vector<8x4xf32>
      %145 = vector.broadcast %141 : i32 to vector<8x4xi32>
      %146 = arith.cmpi eq, %1, %145 : vector<8x4xi32>
      %cst_66 = arith.constant 0.000000e+00 : f32
      %147 = vector.broadcast %cst_66 : f32 to vector<8x4xf32>
      %148 = arith.select %146, %144, %147 : vector<8x4xi1>, vector<8x4xf32>
      %cst_67 = arith.constant dense<0.000000e+00> : vector<4xf32>
      %149 = vector.multi_reduction <add>, %148, %cst_67 [0] : vector<8x4xf32> to vector<4xf32>
      %150 = vector.shape_cast %149 : vector<4xf32> to vector<1x4xf32>
      %c5_i32_68 = arith.constant 5 : i32
      %151 = vector.broadcast %c5_i32_68 : i32 to vector<8x4xi32>
      %152 = arith.cmpi eq, %1, %151 : vector<8x4xi32>
      %cst_69 = arith.constant 0.000000e+00 : f32
      %153 = vector.shape_cast %150 : vector<1x4xf32> to vector<1x4xf32>
      %154 = vector.broadcast %153 : vector<1x4xf32> to vector<8x4xf32>
      %155 = vector.broadcast %cst_69 : f32 to vector<8x4xf32>
      %156 = arith.select %152, %154, %155 : vector<8x4xi1>, vector<8x4xf32>
      %157 = arith.addf %132, %156 : vector<8x4xf32>
      %c8_i32_70 = arith.constant 8 : i32
      %158 = arith.muli %arg5, %c8_i32_70 : i32
      %159 = arith.addi %0, %158 : i32
      %c6_i32 = arith.constant 6 : i32
      %160 = arith.addi %159, %c6_i32 : i32
      %c4_i32_71 = arith.constant 4 : i32
      %161 = arith.muli %160, %c4_i32_71 : i32
      %c0_i32_72 = arith.constant 0 : i32
      %162 = arith.addi %161, %c0_i32_72 : i32
      %163 = arith.index_cast %162 : i32 to index
      %164 = memref.load %arg1[%163] : memref<64xi32, #tpu.memory_space<smem>>
      %c3_i32_73 = arith.constant 3 : i32
      %165 = arith.shrsi %164, %c3_i32_73 : i32
      %c7_i32_74 = arith.constant 7 : i32
      %166 = arith.andi %164, %c7_i32_74 : i32
      %167 = arith.index_cast %165 : i32 to index
      %c0_75 = arith.constant 0 : index
      %c0_76 = arith.constant 0 : index
      %168 = vector.load %arg3[%167, %c0_75, %c0_76] : memref<64x8x4xf32, #tpu.memory_space<vmem>>, vector<1x8x4xf32>
      %169 = vector.shape_cast %168 : vector<1x8x4xf32> to vector<8x4xf32>
      %170 = vector.broadcast %166 : i32 to vector<8x4xi32>
      %171 = arith.cmpi eq, %1, %170 : vector<8x4xi32>
      %cst_77 = arith.constant 0.000000e+00 : f32
      %172 = vector.broadcast %cst_77 : f32 to vector<8x4xf32>
      %173 = arith.select %171, %169, %172 : vector<8x4xi1>, vector<8x4xf32>
      %cst_78 = arith.constant dense<0.000000e+00> : vector<4xf32>
      %174 = vector.multi_reduction <add>, %173, %cst_78 [0] : vector<8x4xf32> to vector<4xf32>
      %175 = vector.shape_cast %174 : vector<4xf32> to vector<1x4xf32>
      %c6_i32_79 = arith.constant 6 : i32
      %176 = vector.broadcast %c6_i32_79 : i32 to vector<8x4xi32>
      %177 = arith.cmpi eq, %1, %176 : vector<8x4xi32>
      %cst_80 = arith.constant 0.000000e+00 : f32
      %178 = vector.shape_cast %175 : vector<1x4xf32> to vector<1x4xf32>
      %179 = vector.broadcast %178 : vector<1x4xf32> to vector<8x4xf32>
      %180 = vector.broadcast %cst_80 : f32 to vector<8x4xf32>
      %181 = arith.select %177, %179, %180 : vector<8x4xi1>, vector<8x4xf32>
      %182 = arith.addf %157, %181 : vector<8x4xf32>
      %c8_i32_81 = arith.constant 8 : i32
      %183 = arith.muli %arg5, %c8_i32_81 : i32
      %184 = arith.addi %0, %183 : i32
      %c7_i32_82 = arith.constant 7 : i32
      %185 = arith.addi %184, %c7_i32_82 : i32
      %c4_i32_83 = arith.constant 4 : i32
      %186 = arith.muli %185, %c4_i32_83 : i32
      %c0_i32_84 = arith.constant 0 : i32
      %187 = arith.addi %186, %c0_i32_84 : i32
      %188 = arith.index_cast %187 : i32 to index
      %189 = memref.load %arg1[%188] : memref<64xi32, #tpu.memory_space<smem>>
      %c3_i32_85 = arith.constant 3 : i32
      %190 = arith.shrsi %189, %c3_i32_85 : i32
      %c7_i32_86 = arith.constant 7 : i32
      %191 = arith.andi %189, %c7_i32_86 : i32
      %192 = arith.index_cast %190 : i32 to index
      %c0_87 = arith.constant 0 : index
      %c0_88 = arith.constant 0 : index
      %193 = vector.load %arg3[%192, %c0_87, %c0_88] : memref<64x8x4xf32, #tpu.memory_space<vmem>>, vector<1x8x4xf32>
      %194 = vector.shape_cast %193 : vector<1x8x4xf32> to vector<8x4xf32>
      %195 = vector.broadcast %191 : i32 to vector<8x4xi32>
      %196 = arith.cmpi eq, %1, %195 : vector<8x4xi32>
      %cst_89 = arith.constant 0.000000e+00 : f32
      %197 = vector.broadcast %cst_89 : f32 to vector<8x4xf32>
      %198 = arith.select %196, %194, %197 : vector<8x4xi1>, vector<8x4xf32>
      %cst_90 = arith.constant dense<0.000000e+00> : vector<4xf32>
      %199 = vector.multi_reduction <add>, %198, %cst_90 [0] : vector<8x4xf32> to vector<4xf32>
      %200 = vector.shape_cast %199 : vector<4xf32> to vector<1x4xf32>
      %c7_i32_91 = arith.constant 7 : i32
      %201 = vector.broadcast %c7_i32_91 : i32 to vector<8x4xi32>
      %202 = arith.cmpi eq, %1, %201 : vector<8x4xi32>
      %cst_92 = arith.constant 0.000000e+00 : f32
      %203 = vector.shape_cast %200 : vector<1x4xf32> to vector<1x4xf32>
      %204 = vector.broadcast %203 : vector<1x4xf32> to vector<8x4xf32>
      %205 = vector.broadcast %cst_92 : f32 to vector<8x4xf32>
      %206 = arith.select %202, %204, %205 : vector<8x4xi1>, vector<8x4xf32>
      %207 = arith.addf %182, %206 : vector<8x4xf32>
      %208 = vector.extract_strided_slice %5 {offsets = [0, 0], sizes = [8, 1], strides = [1, 1]} : vector<8x4xf32> to vector<8x1xf32>
      %209 = vector.broadcast %208 : vector<8x1xf32> to vector<8x4xf32>
      %210 = arith.mulf %209, %207 : vector<8x4xf32>
      %211 = arith.addf %6, %210 : vector<8x4xf32>
      %cst_93 = arith.constant 0.000000e+00 : f32
      %212 = vector.broadcast %cst_93 : f32 to vector<8x4xf32>
      %c8_i32_94 = arith.constant 8 : i32
      %213 = arith.muli %arg5, %c8_i32_94 : i32
      %214 = arith.addi %0, %213 : i32
      %c0_i32_95 = arith.constant 0 : i32
      %215 = arith.addi %214, %c0_i32_95 : i32
      %c4_i32_96 = arith.constant 4 : i32
      %216 = arith.muli %215, %c4_i32_96 : i32
      %c1_i32_97 = arith.constant 1 : i32
      %217 = arith.addi %216, %c1_i32_97 : i32
      %218 = arith.index_cast %217 : i32 to index
      %219 = memref.load %arg1[%218] : memref<64xi32, #tpu.memory_space<smem>>
      %c3_i32_98 = arith.constant 3 : i32
      %220 = arith.shrsi %219, %c3_i32_98 : i32
      %c7_i32_99 = arith.constant 7 : i32
      %221 = arith.andi %219, %c7_i32_99 : i32
      %222 = arith.index_cast %220 : i32 to index
      %c0_100 = arith.constant 0 : index
      %c0_101 = arith.constant 0 : index
      %223 = vector.load %arg3[%222, %c0_100, %c0_101] : memref<64x8x4xf32, #tpu.memory_space<vmem>>, vector<1x8x4xf32>
      %224 = vector.shape_cast %223 : vector<1x8x4xf32> to vector<8x4xf32>
      %225 = vector.broadcast %221 : i32 to vector<8x4xi32>
      %226 = arith.cmpi eq, %1, %225 : vector<8x4xi32>
      %cst_102 = arith.constant 0.000000e+00 : f32
      %227 = vector.broadcast %cst_102 : f32 to vector<8x4xf32>
      %228 = arith.select %226, %224, %227 : vector<8x4xi1>, vector<8x4xf32>
      %cst_103 = arith.constant dense<0.000000e+00> : vector<4xf32>
      %229 = vector.multi_reduction <add>, %228, %cst_103 [0] : vector<8x4xf32> to vector<4xf32>
      %230 = vector.shape_cast %229 : vector<4xf32> to vector<1x4xf32>
      %c0_i32_104 = arith.constant 0 : i32
      %231 = vector.broadcast %c0_i32_104 : i32 to vector<8x4xi32>
      %232 = arith.cmpi eq, %1, %231 : vector<8x4xi32>
      %cst_105 = arith.constant 0.000000e+00 : f32
      %233 = vector.shape_cast %230 : vector<1x4xf32> to vector<1x4xf32>
      %234 = vector.broadcast %233 : vector<1x4xf32> to vector<8x4xf32>
      %235 = vector.broadcast %cst_105 : f32 to vector<8x4xf32>
      %236 = arith.select %232, %234, %235 : vector<8x4xi1>, vector<8x4xf32>
      %237 = arith.addf %212, %236 : vector<8x4xf32>
      %c8_i32_106 = arith.constant 8 : i32
      %238 = arith.muli %arg5, %c8_i32_106 : i32
      %239 = arith.addi %0, %238 : i32
      %c1_i32_107 = arith.constant 1 : i32
      %240 = arith.addi %239, %c1_i32_107 : i32
      %c4_i32_108 = arith.constant 4 : i32
      %241 = arith.muli %240, %c4_i32_108 : i32
      %c1_i32_109 = arith.constant 1 : i32
      %242 = arith.addi %241, %c1_i32_109 : i32
      %243 = arith.index_cast %242 : i32 to index
      %244 = memref.load %arg1[%243] : memref<64xi32, #tpu.memory_space<smem>>
      %c3_i32_110 = arith.constant 3 : i32
      %245 = arith.shrsi %244, %c3_i32_110 : i32
      %c7_i32_111 = arith.constant 7 : i32
      %246 = arith.andi %244, %c7_i32_111 : i32
      %247 = arith.index_cast %245 : i32 to index
      %c0_112 = arith.constant 0 : index
      %c0_113 = arith.constant 0 : index
      %248 = vector.load %arg3[%247, %c0_112, %c0_113] : memref<64x8x4xf32, #tpu.memory_space<vmem>>, vector<1x8x4xf32>
      %249 = vector.shape_cast %248 : vector<1x8x4xf32> to vector<8x4xf32>
      %250 = vector.broadcast %246 : i32 to vector<8x4xi32>
      %251 = arith.cmpi eq, %1, %250 : vector<8x4xi32>
      %cst_114 = arith.constant 0.000000e+00 : f32
      %252 = vector.broadcast %cst_114 : f32 to vector<8x4xf32>
      %253 = arith.select %251, %249, %252 : vector<8x4xi1>, vector<8x4xf32>
      %cst_115 = arith.constant dense<0.000000e+00> : vector<4xf32>
      %254 = vector.multi_reduction <add>, %253, %cst_115 [0] : vector<8x4xf32> to vector<4xf32>
      %255 = vector.shape_cast %254 : vector<4xf32> to vector<1x4xf32>
      %c1_i32_116 = arith.constant 1 : i32
      %256 = vector.broadcast %c1_i32_116 : i32 to vector<8x4xi32>
      %257 = arith.cmpi eq, %1, %256 : vector<8x4xi32>
      %cst_117 = arith.constant 0.000000e+00 : f32
      %258 = vector.shape_cast %255 : vector<1x4xf32> to vector<1x4xf32>
      %259 = vector.broadcast %258 : vector<1x4xf32> to vector<8x4xf32>
      %260 = vector.broadcast %cst_117 : f32 to vector<8x4xf32>
      %261 = arith.select %257, %259, %260 : vector<8x4xi1>, vector<8x4xf32>
      %262 = arith.addf %237, %261 : vector<8x4xf32>
      %c8_i32_118 = arith.constant 8 : i32
      %263 = arith.muli %arg5, %c8_i32_118 : i32
      %264 = arith.addi %0, %263 : i32
      %c2_i32_119 = arith.constant 2 : i32
      %265 = arith.addi %264, %c2_i32_119 : i32
      %c4_i32_120 = arith.constant 4 : i32
      %266 = arith.muli %265, %c4_i32_120 : i32
      %c1_i32_121 = arith.constant 1 : i32
      %267 = arith.addi %266, %c1_i32_121 : i32
      %268 = arith.index_cast %267 : i32 to index
      %269 = memref.load %arg1[%268] : memref<64xi32, #tpu.memory_space<smem>>
      %c3_i32_122 = arith.constant 3 : i32
      %270 = arith.shrsi %269, %c3_i32_122 : i32
      %c7_i32_123 = arith.constant 7 : i32
      %271 = arith.andi %269, %c7_i32_123 : i32
      %272 = arith.index_cast %270 : i32 to index
      %c0_124 = arith.constant 0 : index
      %c0_125 = arith.constant 0 : index
      %273 = vector.load %arg3[%272, %c0_124, %c0_125] : memref<64x8x4xf32, #tpu.memory_space<vmem>>, vector<1x8x4xf32>
      %274 = vector.shape_cast %273 : vector<1x8x4xf32> to vector<8x4xf32>
      %275 = vector.broadcast %271 : i32 to vector<8x4xi32>
      %276 = arith.cmpi eq, %1, %275 : vector<8x4xi32>
      %cst_126 = arith.constant 0.000000e+00 : f32
      %277 = vector.broadcast %cst_126 : f32 to vector<8x4xf32>
      %278 = arith.select %276, %274, %277 : vector<8x4xi1>, vector<8x4xf32>
      %cst_127 = arith.constant dense<0.000000e+00> : vector<4xf32>
      %279 = vector.multi_reduction <add>, %278, %cst_127 [0] : vector<8x4xf32> to vector<4xf32>
      %280 = vector.shape_cast %279 : vector<4xf32> to vector<1x4xf32>
      %c2_i32_128 = arith.constant 2 : i32
      %281 = vector.broadcast %c2_i32_128 : i32 to vector<8x4xi32>
      %282 = arith.cmpi eq, %1, %281 : vector<8x4xi32>
      %cst_129 = arith.constant 0.000000e+00 : f32
      %283 = vector.shape_cast %280 : vector<1x4xf32> to vector<1x4xf32>
      %284 = vector.broadcast %283 : vector<1x4xf32> to vector<8x4xf32>
      %285 = vector.broadcast %cst_129 : f32 to vector<8x4xf32>
      %286 = arith.select %282, %284, %285 : vector<8x4xi1>, vector<8x4xf32>
      %287 = arith.addf %262, %286 : vector<8x4xf32>
      %c8_i32_130 = arith.constant 8 : i32
      %288 = arith.muli %arg5, %c8_i32_130 : i32
      %289 = arith.addi %0, %288 : i32
      %c3_i32_131 = arith.constant 3 : i32
      %290 = arith.addi %289, %c3_i32_131 : i32
      %c4_i32_132 = arith.constant 4 : i32
      %291 = arith.muli %290, %c4_i32_132 : i32
      %c1_i32_133 = arith.constant 1 : i32
      %292 = arith.addi %291, %c1_i32_133 : i32
      %293 = arith.index_cast %292 : i32 to index
      %294 = memref.load %arg1[%293] : memref<64xi32, #tpu.memory_space<smem>>
      %c3_i32_134 = arith.constant 3 : i32
      %295 = arith.shrsi %294, %c3_i32_134 : i32
      %c7_i32_135 = arith.constant 7 : i32
      %296 = arith.andi %294, %c7_i32_135 : i32
      %297 = arith.index_cast %295 : i32 to index
      %c0_136 = arith.constant 0 : index
      %c0_137 = arith.constant 0 : index
      %298 = vector.load %arg3[%297, %c0_136, %c0_137] : memref<64x8x4xf32, #tpu.memory_space<vmem>>, vector<1x8x4xf32>
      %299 = vector.shape_cast %298 : vector<1x8x4xf32> to vector<8x4xf32>
      %300 = vector.broadcast %296 : i32 to vector<8x4xi32>
      %301 = arith.cmpi eq, %1, %300 : vector<8x4xi32>
      %cst_138 = arith.constant 0.000000e+00 : f32
      %302 = vector.broadcast %cst_138 : f32 to vector<8x4xf32>
      %303 = arith.select %301, %299, %302 : vector<8x4xi1>, vector<8x4xf32>
      %cst_139 = arith.constant dense<0.000000e+00> : vector<4xf32>
      %304 = vector.multi_reduction <add>, %303, %cst_139 [0] : vector<8x4xf32> to vector<4xf32>
      %305 = vector.shape_cast %304 : vector<4xf32> to vector<1x4xf32>
      %c3_i32_140 = arith.constant 3 : i32
      %306 = vector.broadcast %c3_i32_140 : i32 to vector<8x4xi32>
      %307 = arith.cmpi eq, %1, %306 : vector<8x4xi32>
      %cst_141 = arith.constant 0.000000e+00 : f32
      %308 = vector.shape_cast %305 : vector<1x4xf32> to vector<1x4xf32>
      %309 = vector.broadcast %308 : vector<1x4xf32> to vector<8x4xf32>
      %310 = vector.broadcast %cst_141 : f32 to vector<8x4xf32>
      %311 = arith.select %307, %309, %310 : vector<8x4xi1>, vector<8x4xf32>
      %312 = arith.addf %287, %311 : vector<8x4xf32>
      %c8_i32_142 = arith.constant 8 : i32
      %313 = arith.muli %arg5, %c8_i32_142 : i32
      %314 = arith.addi %0, %313 : i32
      %c4_i32_143 = arith.constant 4 : i32
      %315 = arith.addi %314, %c4_i32_143 : i32
      %c4_i32_144 = arith.constant 4 : i32
      %316 = arith.muli %315, %c4_i32_144 : i32
      %c1_i32_145 = arith.constant 1 : i32
      %317 = arith.addi %316, %c1_i32_145 : i32
      %318 = arith.index_cast %317 : i32 to index
      %319 = memref.load %arg1[%318] : memref<64xi32, #tpu.memory_space<smem>>
      %c3_i32_146 = arith.constant 3 : i32
      %320 = arith.shrsi %319, %c3_i32_146 : i32
      %c7_i32_147 = arith.constant 7 : i32
      %321 = arith.andi %319, %c7_i32_147 : i32
      %322 = arith.index_cast %320 : i32 to index
      %c0_148 = arith.constant 0 : index
      %c0_149 = arith.constant 0 : index
      %323 = vector.load %arg3[%322, %c0_148, %c0_149] : memref<64x8x4xf32, #tpu.memory_space<vmem>>, vector<1x8x4xf32>
      %324 = vector.shape_cast %323 : vector<1x8x4xf32> to vector<8x4xf32>
      %325 = vector.broadcast %321 : i32 to vector<8x4xi32>
      %326 = arith.cmpi eq, %1, %325 : vector<8x4xi32>
      %cst_150 = arith.constant 0.000000e+00 : f32
      %327 = vector.broadcast %cst_150 : f32 to vector<8x4xf32>
      %328 = arith.select %326, %324, %327 : vector<8x4xi1>, vector<8x4xf32>
      %cst_151 = arith.constant dense<0.000000e+00> : vector<4xf32>
      %329 = vector.multi_reduction <add>, %328, %cst_151 [0] : vector<8x4xf32> to vector<4xf32>
      %330 = vector.shape_cast %329 : vector<4xf32> to vector<1x4xf32>
      %c4_i32_152 = arith.constant 4 : i32
      %331 = vector.broadcast %c4_i32_152 : i32 to vector<8x4xi32>
      %332 = arith.cmpi eq, %1, %331 : vector<8x4xi32>
      %cst_153 = arith.constant 0.000000e+00 : f32
      %333 = vector.shape_cast %330 : vector<1x4xf32> to vector<1x4xf32>
      %334 = vector.broadcast %333 : vector<1x4xf32> to vector<8x4xf32>
      %335 = vector.broadcast %cst_153 : f32 to vector<8x4xf32>
      %336 = arith.select %332, %334, %335 : vector<8x4xi1>, vector<8x4xf32>
      %337 = arith.addf %312, %336 : vector<8x4xf32>
      %c8_i32_154 = arith.constant 8 : i32
      %338 = arith.muli %arg5, %c8_i32_154 : i32
      %339 = arith.addi %0, %338 : i32
      %c5_i32_155 = arith.constant 5 : i32
      %340 = arith.addi %339, %c5_i32_155 : i32
      %c4_i32_156 = arith.constant 4 : i32
      %341 = arith.muli %340, %c4_i32_156 : i32
      %c1_i32_157 = arith.constant 1 : i32
      %342 = arith.addi %341, %c1_i32_157 : i32
      %343 = arith.index_cast %342 : i32 to index
      %344 = memref.load %arg1[%343] : memref<64xi32, #tpu.memory_space<smem>>
      %c3_i32_158 = arith.constant 3 : i32
      %345 = arith.shrsi %344, %c3_i32_158 : i32
      %c7_i32_159 = arith.constant 7 : i32
      %346 = arith.andi %344, %c7_i32_159 : i32
      %347 = arith.index_cast %345 : i32 to index
      %c0_160 = arith.constant 0 : index
      %c0_161 = arith.constant 0 : index
      %348 = vector.load %arg3[%347, %c0_160, %c0_161] : memref<64x8x4xf32, #tpu.memory_space<vmem>>, vector<1x8x4xf32>
      %349 = vector.shape_cast %348 : vector<1x8x4xf32> to vector<8x4xf32>
      %350 = vector.broadcast %346 : i32 to vector<8x4xi32>
      %351 = arith.cmpi eq, %1, %350 : vector<8x4xi32>
      %cst_162 = arith.constant 0.000000e+00 : f32
      %352 = vector.broadcast %cst_162 : f32 to vector<8x4xf32>
      %353 = arith.select %351, %349, %352 : vector<8x4xi1>, vector<8x4xf32>
      %cst_163 = arith.constant dense<0.000000e+00> : vector<4xf32>
      %354 = vector.multi_reduction <add>, %353, %cst_163 [0] : vector<8x4xf32> to vector<4xf32>
      %355 = vector.shape_cast %354 : vector<4xf32> to vector<1x4xf32>
      %c5_i32_164 = arith.constant 5 : i32
      %356 = vector.broadcast %c5_i32_164 : i32 to vector<8x4xi32>
      %357 = arith.cmpi eq, %1, %356 : vector<8x4xi32>
      %cst_165 = arith.constant 0.000000e+00 : f32
      %358 = vector.shape_cast %355 : vector<1x4xf32> to vector<1x4xf32>
      %359 = vector.broadcast %358 : vector<1x4xf32> to vector<8x4xf32>
      %360 = vector.broadcast %cst_165 : f32 to vector<8x4xf32>
      %361 = arith.select %357, %359, %360 : vector<8x4xi1>, vector<8x4xf32>
      %362 = arith.addf %337, %361 : vector<8x4xf32>
      %c8_i32_166 = arith.constant 8 : i32
      %363 = arith.muli %arg5, %c8_i32_166 : i32
      %364 = arith.addi %0, %363 : i32
      %c6_i32_167 = arith.constant 6 : i32
      %365 = arith.addi %364, %c6_i32_167 : i32
      %c4_i32_168 = arith.constant 4 : i32
      %366 = arith.muli %365, %c4_i32_168 : i32
      %c1_i32_169 = arith.constant 1 : i32
      %367 = arith.addi %366, %c1_i32_169 : i32
      %368 = arith.index_cast %367 : i32 to index
      %369 = memref.load %arg1[%368] : memref<64xi32, #tpu.memory_space<smem>>
      %c3_i32_170 = arith.constant 3 : i32
      %370 = arith.shrsi %369, %c3_i32_170 : i32
      %c7_i32_171 = arith.constant 7 : i32
      %371 = arith.andi %369, %c7_i32_171 : i32
      %372 = arith.index_cast %370 : i32 to index
      %c0_172 = arith.constant 0 : index
      %c0_173 = arith.constant 0 : index
      %373 = vector.load %arg3[%372, %c0_172, %c0_173] : memref<64x8x4xf32, #tpu.memory_space<vmem>>, vector<1x8x4xf32>
      %374 = vector.shape_cast %373 : vector<1x8x4xf32> to vector<8x4xf32>
      %375 = vector.broadcast %371 : i32 to vector<8x4xi32>
      %376 = arith.cmpi eq, %1, %375 : vector<8x4xi32>
      %cst_174 = arith.constant 0.000000e+00 : f32
      %377 = vector.broadcast %cst_174 : f32 to vector<8x4xf32>
      %378 = arith.select %376, %374, %377 : vector<8x4xi1>, vector<8x4xf32>
      %cst_175 = arith.constant dense<0.000000e+00> : vector<4xf32>
      %379 = vector.multi_reduction <add>, %378, %cst_175 [0] : vector<8x4xf32> to vector<4xf32>
      %380 = vector.shape_cast %379 : vector<4xf32> to vector<1x4xf32>
      %c6_i32_176 = arith.constant 6 : i32
      %381 = vector.broadcast %c6_i32_176 : i32 to vector<8x4xi32>
      %382 = arith.cmpi eq, %1, %381 : vector<8x4xi32>
      %cst_177 = arith.constant 0.000000e+00 : f32
      %383 = vector.shape_cast %380 : vector<1x4xf32> to vector<1x4xf32>
      %384 = vector.broadcast %383 : vector<1x4xf32> to vector<8x4xf32>
      %385 = vector.broadcast %cst_177 : f32 to vector<8x4xf32>
      %386 = arith.select %382, %384, %385 : vector<8x4xi1>, vector<8x4xf32>
      %387 = arith.addf %362, %386 : vector<8x4xf32>
      %c8_i32_178 = arith.constant 8 : i32
      %388 = arith.muli %arg5, %c8_i32_178 : i32
      %389 = arith.addi %0, %388 : i32
      %c7_i32_179 = arith.constant 7 : i32
      %390 = arith.addi %389, %c7_i32_179 : i32
      %c4_i32_180 = arith.constant 4 : i32
      %391 = arith.muli %390, %c4_i32_180 : i32
      %c1_i32_181 = arith.constant 1 : i32
      %392 = arith.addi %391, %c1_i32_181 : i32
      %393 = arith.index_cast %392 : i32 to index
      %394 = memref.load %arg1[%393] : memref<64xi32, #tpu.memory_space<smem>>
      %c3_i32_182 = arith.constant 3 : i32
      %395 = arith.shrsi %394, %c3_i32_182 : i32
      %c7_i32_183 = arith.constant 7 : i32
      %396 = arith.andi %394, %c7_i32_183 : i32
      %397 = arith.index_cast %395 : i32 to index
      %c0_184 = arith.constant 0 : index
      %c0_185 = arith.constant 0 : index
      %398 = vector.load %arg3[%397, %c0_184, %c0_185] : memref<64x8x4xf32, #tpu.memory_space<vmem>>, vector<1x8x4xf32>
      %399 = vector.shape_cast %398 : vector<1x8x4xf32> to vector<8x4xf32>
      %400 = vector.broadcast %396 : i32 to vector<8x4xi32>
      %401 = arith.cmpi eq, %1, %400 : vector<8x4xi32>
      %cst_186 = arith.constant 0.000000e+00 : f32
      %402 = vector.broadcast %cst_186 : f32 to vector<8x4xf32>
      %403 = arith.select %401, %399, %402 : vector<8x4xi1>, vector<8x4xf32>
      %cst_187 = arith.constant dense<0.000000e+00> : vector<4xf32>
      %404 = vector.multi_reduction <add>, %403, %cst_187 [0] : vector<8x4xf32> to vector<4xf32>
      %405 = vector.shape_cast %404 : vector<4xf32> to vector<1x4xf32>
      %c7_i32_188 = arith.constant 7 : i32
      %406 = vector.broadcast %c7_i32_188 : i32 to vector<8x4xi32>
      %407 = arith.cmpi eq, %1, %406 : vector<8x4xi32>
      %cst_189 = arith.constant 0.000000e+00 : f32
      %408 = vector.shape_cast %405 : vector<1x4xf32> to vector<1x4xf32>
      %409 = vector.broadcast %408 : vector<1x4xf32> to vector<8x4xf32>
      %410 = vector.broadcast %cst_189 : f32 to vector<8x4xf32>
      %411 = arith.select %407, %409, %410 : vector<8x4xi1>, vector<8x4xf32>
      %412 = arith.addf %387, %411 : vector<8x4xf32>
      %413 = vector.extract_strided_slice %5 {offsets = [0, 1], sizes = [8, 1], strides = [1, 1]} : vector<8x4xf32> to vector<8x1xf32>
      %414 = vector.broadcast %413 : vector<8x1xf32> to vector<8x4xf32>
      %415 = arith.mulf %414, %412 : vector<8x4xf32>
      %416 = arith.addf %211, %415 : vector<8x4xf32>
      %cst_190 = arith.constant 0.000000e+00 : f32
      %417 = vector.broadcast %cst_190 : f32 to vector<8x4xf32>
      %c8_i32_191 = arith.constant 8 : i32
      %418 = arith.muli %arg5, %c8_i32_191 : i32
      %419 = arith.addi %0, %418 : i32
      %c0_i32_192 = arith.constant 0 : i32
      %420 = arith.addi %419, %c0_i32_192 : i32
      %c4_i32_193 = arith.constant 4 : i32
      %421 = arith.muli %420, %c4_i32_193 : i32
      %c2_i32_194 = arith.constant 2 : i32
      %422 = arith.addi %421, %c2_i32_194 : i32
      %423 = arith.index_cast %422 : i32 to index
      %424 = memref.load %arg1[%423] : memref<64xi32, #tpu.memory_space<smem>>
      %c3_i32_195 = arith.constant 3 : i32
      %425 = arith.shrsi %424, %c3_i32_195 : i32
      %c7_i32_196 = arith.constant 7 : i32
      %426 = arith.andi %424, %c7_i32_196 : i32
      %427 = arith.index_cast %425 : i32 to index
      %c0_197 = arith.constant 0 : index
      %c0_198 = arith.constant 0 : index
      %428 = vector.load %arg3[%427, %c0_197, %c0_198] : memref<64x8x4xf32, #tpu.memory_space<vmem>>, vector<1x8x4xf32>
      %429 = vector.shape_cast %428 : vector<1x8x4xf32> to vector<8x4xf32>
      %430 = vector.broadcast %426 : i32 to vector<8x4xi32>
      %431 = arith.cmpi eq, %1, %430 : vector<8x4xi32>
      %cst_199 = arith.constant 0.000000e+00 : f32
      %432 = vector.broadcast %cst_199 : f32 to vector<8x4xf32>
      %433 = arith.select %431, %429, %432 : vector<8x4xi1>, vector<8x4xf32>
      %cst_200 = arith.constant dense<0.000000e+00> : vector<4xf32>
      %434 = vector.multi_reduction <add>, %433, %cst_200 [0] : vector<8x4xf32> to vector<4xf32>
      %435 = vector.shape_cast %434 : vector<4xf32> to vector<1x4xf32>
      %c0_i32_201 = arith.constant 0 : i32
      %436 = vector.broadcast %c0_i32_201 : i32 to vector<8x4xi32>
      %437 = arith.cmpi eq, %1, %436 : vector<8x4xi32>
      %cst_202 = arith.constant 0.000000e+00 : f32
      %438 = vector.shape_cast %435 : vector<1x4xf32> to vector<1x4xf32>
      %439 = vector.broadcast %438 : vector<1x4xf32> to vector<8x4xf32>
      %440 = vector.broadcast %cst_202 : f32 to vector<8x4xf32>
      %441 = arith.select %437, %439, %440 : vector<8x4xi1>, vector<8x4xf32>
      %442 = arith.addf %417, %441 : vector<8x4xf32>
      %c8_i32_203 = arith.constant 8 : i32
      %443 = arith.muli %arg5, %c8_i32_203 : i32
      %444 = arith.addi %0, %443 : i32
      %c1_i32_204 = arith.constant 1 : i32
      %445 = arith.addi %444, %c1_i32_204 : i32
      %c4_i32_205 = arith.constant 4 : i32
      %446 = arith.muli %445, %c4_i32_205 : i32
      %c2_i32_206 = arith.constant 2 : i32
      %447 = arith.addi %446, %c2_i32_206 : i32
      %448 = arith.index_cast %447 : i32 to index
      %449 = memref.load %arg1[%448] : memref<64xi32, #tpu.memory_space<smem>>
      %c3_i32_207 = arith.constant 3 : i32
      %450 = arith.shrsi %449, %c3_i32_207 : i32
      %c7_i32_208 = arith.constant 7 : i32
      %451 = arith.andi %449, %c7_i32_208 : i32
      %452 = arith.index_cast %450 : i32 to index
      %c0_209 = arith.constant 0 : index
      %c0_210 = arith.constant 0 : index
      %453 = vector.load %arg3[%452, %c0_209, %c0_210] : memref<64x8x4xf32, #tpu.memory_space<vmem>>, vector<1x8x4xf32>
      %454 = vector.shape_cast %453 : vector<1x8x4xf32> to vector<8x4xf32>
      %455 = vector.broadcast %451 : i32 to vector<8x4xi32>
      %456 = arith.cmpi eq, %1, %455 : vector<8x4xi32>
      %cst_211 = arith.constant 0.000000e+00 : f32
      %457 = vector.broadcast %cst_211 : f32 to vector<8x4xf32>
      %458 = arith.select %456, %454, %457 : vector<8x4xi1>, vector<8x4xf32>
      %cst_212 = arith.constant dense<0.000000e+00> : vector<4xf32>
      %459 = vector.multi_reduction <add>, %458, %cst_212 [0] : vector<8x4xf32> to vector<4xf32>
      %460 = vector.shape_cast %459 : vector<4xf32> to vector<1x4xf32>
      %c1_i32_213 = arith.constant 1 : i32
      %461 = vector.broadcast %c1_i32_213 : i32 to vector<8x4xi32>
      %462 = arith.cmpi eq, %1, %461 : vector<8x4xi32>
      %cst_214 = arith.constant 0.000000e+00 : f32
      %463 = vector.shape_cast %460 : vector<1x4xf32> to vector<1x4xf32>
      %464 = vector.broadcast %463 : vector<1x4xf32> to vector<8x4xf32>
      %465 = vector.broadcast %cst_214 : f32 to vector<8x4xf32>
      %466 = arith.select %462, %464, %465 : vector<8x4xi1>, vector<8x4xf32>
      %467 = arith.addf %442, %466 : vector<8x4xf32>
      %c8_i32_215 = arith.constant 8 : i32
      %468 = arith.muli %arg5, %c8_i32_215 : i32
      %469 = arith.addi %0, %468 : i32
      %c2_i32_216 = arith.constant 2 : i32
      %470 = arith.addi %469, %c2_i32_216 : i32
      %c4_i32_217 = arith.constant 4 : i32
      %471 = arith.muli %470, %c4_i32_217 : i32
      %c2_i32_218 = arith.constant 2 : i32
      %472 = arith.addi %471, %c2_i32_218 : i32
      %473 = arith.index_cast %472 : i32 to index
      %474 = memref.load %arg1[%473] : memref<64xi32, #tpu.memory_space<smem>>
      %c3_i32_219 = arith.constant 3 : i32
      %475 = arith.shrsi %474, %c3_i32_219 : i32
      %c7_i32_220 = arith.constant 7 : i32
      %476 = arith.andi %474, %c7_i32_220 : i32
      %477 = arith.index_cast %475 : i32 to index
      %c0_221 = arith.constant 0 : index
      %c0_222 = arith.constant 0 : index
      %478 = vector.load %arg3[%477, %c0_221, %c0_222] : memref<64x8x4xf32, #tpu.memory_space<vmem>>, vector<1x8x4xf32>
      %479 = vector.shape_cast %478 : vector<1x8x4xf32> to vector<8x4xf32>
      %480 = vector.broadcast %476 : i32 to vector<8x4xi32>
      %481 = arith.cmpi eq, %1, %480 : vector<8x4xi32>
      %cst_223 = arith.constant 0.000000e+00 : f32
      %482 = vector.broadcast %cst_223 : f32 to vector<8x4xf32>
      %483 = arith.select %481, %479, %482 : vector<8x4xi1>, vector<8x4xf32>
      %cst_224 = arith.constant dense<0.000000e+00> : vector<4xf32>
      %484 = vector.multi_reduction <add>, %483, %cst_224 [0] : vector<8x4xf32> to vector<4xf32>
      %485 = vector.shape_cast %484 : vector<4xf32> to vector<1x4xf32>
      %c2_i32_225 = arith.constant 2 : i32
      %486 = vector.broadcast %c2_i32_225 : i32 to vector<8x4xi32>
      %487 = arith.cmpi eq, %1, %486 : vector<8x4xi32>
      %cst_226 = arith.constant 0.000000e+00 : f32
      %488 = vector.shape_cast %485 : vector<1x4xf32> to vector<1x4xf32>
      %489 = vector.broadcast %488 : vector<1x4xf32> to vector<8x4xf32>
      %490 = vector.broadcast %cst_226 : f32 to vector<8x4xf32>
      %491 = arith.select %487, %489, %490 : vector<8x4xi1>, vector<8x4xf32>
      %492 = arith.addf %467, %491 : vector<8x4xf32>
      %c8_i32_227 = arith.constant 8 : i32
      %493 = arith.muli %arg5, %c8_i32_227 : i32
      %494 = arith.addi %0, %493 : i32
      %c3_i32_228 = arith.constant 3 : i32
      %495 = arith.addi %494, %c3_i32_228 : i32
      %c4_i32_229 = arith.constant 4 : i32
      %496 = arith.muli %495, %c4_i32_229 : i32
      %c2_i32_230 = arith.constant 2 : i32
      %497 = arith.addi %496, %c2_i32_230 : i32
      %498 = arith.index_cast %497 : i32 to index
      %499 = memref.load %arg1[%498] : memref<64xi32, #tpu.memory_space<smem>>
      %c3_i32_231 = arith.constant 3 : i32
      %500 = arith.shrsi %499, %c3_i32_231 : i32
      %c7_i32_232 = arith.constant 7 : i32
      %501 = arith.andi %499, %c7_i32_232 : i32
      %502 = arith.index_cast %500 : i32 to index
      %c0_233 = arith.constant 0 : index
      %c0_234 = arith.constant 0 : index
      %503 = vector.load %arg3[%502, %c0_233, %c0_234] : memref<64x8x4xf32, #tpu.memory_space<vmem>>, vector<1x8x4xf32>
      %504 = vector.shape_cast %503 : vector<1x8x4xf32> to vector<8x4xf32>
      %505 = vector.broadcast %501 : i32 to vector<8x4xi32>
      %506 = arith.cmpi eq, %1, %505 : vector<8x4xi32>
      %cst_235 = arith.constant 0.000000e+00 : f32
      %507 = vector.broadcast %cst_235 : f32 to vector<8x4xf32>
      %508 = arith.select %506, %504, %507 : vector<8x4xi1>, vector<8x4xf32>
      %cst_236 = arith.constant dense<0.000000e+00> : vector<4xf32>
      %509 = vector.multi_reduction <add>, %508, %cst_236 [0] : vector<8x4xf32> to vector<4xf32>
      %510 = vector.shape_cast %509 : vector<4xf32> to vector<1x4xf32>
      %c3_i32_237 = arith.constant 3 : i32
      %511 = vector.broadcast %c3_i32_237 : i32 to vector<8x4xi32>
      %512 = arith.cmpi eq, %1, %511 : vector<8x4xi32>
      %cst_238 = arith.constant 0.000000e+00 : f32
      %513 = vector.shape_cast %510 : vector<1x4xf32> to vector<1x4xf32>
      %514 = vector.broadcast %513 : vector<1x4xf32> to vector<8x4xf32>
      %515 = vector.broadcast %cst_238 : f32 to vector<8x4xf32>
      %516 = arith.select %512, %514, %515 : vector<8x4xi1>, vector<8x4xf32>
      %517 = arith.addf %492, %516 : vector<8x4xf32>
      %c8_i32_239 = arith.constant 8 : i32
      %518 = arith.muli %arg5, %c8_i32_239 : i32
      %519 = arith.addi %0, %518 : i32
      %c4_i32_240 = arith.constant 4 : i32
      %520 = arith.addi %519, %c4_i32_240 : i32
      %c4_i32_241 = arith.constant 4 : i32
      %521 = arith.muli %520, %c4_i32_241 : i32
      %c2_i32_242 = arith.constant 2 : i32
      %522 = arith.addi %521, %c2_i32_242 : i32
      %523 = arith.index_cast %522 : i32 to index
      %524 = memref.load %arg1[%523] : memref<64xi32, #tpu.memory_space<smem>>
      %c3_i32_243 = arith.constant 3 : i32
      %525 = arith.shrsi %524, %c3_i32_243 : i32
      %c7_i32_244 = arith.constant 7 : i32
      %526 = arith.andi %524, %c7_i32_244 : i32
      %527 = arith.index_cast %525 : i32 to index
      %c0_245 = arith.constant 0 : index
      %c0_246 = arith.constant 0 : index
      %528 = vector.load %arg3[%527, %c0_245, %c0_246] : memref<64x8x4xf32, #tpu.memory_space<vmem>>, vector<1x8x4xf32>
      %529 = vector.shape_cast %528 : vector<1x8x4xf32> to vector<8x4xf32>
      %530 = vector.broadcast %526 : i32 to vector<8x4xi32>
      %531 = arith.cmpi eq, %1, %530 : vector<8x4xi32>
      %cst_247 = arith.constant 0.000000e+00 : f32
      %532 = vector.broadcast %cst_247 : f32 to vector<8x4xf32>
      %533 = arith.select %531, %529, %532 : vector<8x4xi1>, vector<8x4xf32>
      %cst_248 = arith.constant dense<0.000000e+00> : vector<4xf32>
      %534 = vector.multi_reduction <add>, %533, %cst_248 [0] : vector<8x4xf32> to vector<4xf32>
      %535 = vector.shape_cast %534 : vector<4xf32> to vector<1x4xf32>
      %c4_i32_249 = arith.constant 4 : i32
      %536 = vector.broadcast %c4_i32_249 : i32 to vector<8x4xi32>
      %537 = arith.cmpi eq, %1, %536 : vector<8x4xi32>
      %cst_250 = arith.constant 0.000000e+00 : f32
      %538 = vector.shape_cast %535 : vector<1x4xf32> to vector<1x4xf32>
      %539 = vector.broadcast %538 : vector<1x4xf32> to vector<8x4xf32>
      %540 = vector.broadcast %cst_250 : f32 to vector<8x4xf32>
      %541 = arith.select %537, %539, %540 : vector<8x4xi1>, vector<8x4xf32>
      %542 = arith.addf %517, %541 : vector<8x4xf32>
      %c8_i32_251 = arith.constant 8 : i32
      %543 = arith.muli %arg5, %c8_i32_251 : i32
      %544 = arith.addi %0, %543 : i32
      %c5_i32_252 = arith.constant 5 : i32
      %545 = arith.addi %544, %c5_i32_252 : i32
      %c4_i32_253 = arith.constant 4 : i32
      %546 = arith.muli %545, %c4_i32_253 : i32
      %c2_i32_254 = arith.constant 2 : i32
      %547 = arith.addi %546, %c2_i32_254 : i32
      %548 = arith.index_cast %547 : i32 to index
      %549 = memref.load %arg1[%548] : memref<64xi32, #tpu.memory_space<smem>>
      %c3_i32_255 = arith.constant 3 : i32
      %550 = arith.shrsi %549, %c3_i32_255 : i32
      %c7_i32_256 = arith.constant 7 : i32
      %551 = arith.andi %549, %c7_i32_256 : i32
      %552 = arith.index_cast %550 : i32 to index
      %c0_257 = arith.constant 0 : index
      %c0_258 = arith.constant 0 : index
      %553 = vector.load %arg3[%552, %c0_257, %c0_258] : memref<64x8x4xf32, #tpu.memory_space<vmem>>, vector<1x8x4xf32>
      %554 = vector.shape_cast %553 : vector<1x8x4xf32> to vector<8x4xf32>
      %555 = vector.broadcast %551 : i32 to vector<8x4xi32>
      %556 = arith.cmpi eq, %1, %555 : vector<8x4xi32>
      %cst_259 = arith.constant 0.000000e+00 : f32
      %557 = vector.broadcast %cst_259 : f32 to vector<8x4xf32>
      %558 = arith.select %556, %554, %557 : vector<8x4xi1>, vector<8x4xf32>
      %cst_260 = arith.constant dense<0.000000e+00> : vector<4xf32>
      %559 = vector.multi_reduction <add>, %558, %cst_260 [0] : vector<8x4xf32> to vector<4xf32>
      %560 = vector.shape_cast %559 : vector<4xf32> to vector<1x4xf32>
      %c5_i32_261 = arith.constant 5 : i32
      %561 = vector.broadcast %c5_i32_261 : i32 to vector<8x4xi32>
      %562 = arith.cmpi eq, %1, %561 : vector<8x4xi32>
      %cst_262 = arith.constant 0.000000e+00 : f32
      %563 = vector.shape_cast %560 : vector<1x4xf32> to vector<1x4xf32>
      %564 = vector.broadcast %563 : vector<1x4xf32> to vector<8x4xf32>
      %565 = vector.broadcast %cst_262 : f32 to vector<8x4xf32>
      %566 = arith.select %562, %564, %565 : vector<8x4xi1>, vector<8x4xf32>
      %567 = arith.addf %542, %566 : vector<8x4xf32>
      %c8_i32_263 = arith.constant 8 : i32
      %568 = arith.muli %arg5, %c8_i32_263 : i32
      %569 = arith.addi %0, %568 : i32
      %c6_i32_264 = arith.constant 6 : i32
      %570 = arith.addi %569, %c6_i32_264 : i32
      %c4_i32_265 = arith.constant 4 : i32
      %571 = arith.muli %570, %c4_i32_265 : i32
      %c2_i32_266 = arith.constant 2 : i32
      %572 = arith.addi %571, %c2_i32_266 : i32
      %573 = arith.index_cast %572 : i32 to index
      %574 = memref.load %arg1[%573] : memref<64xi32, #tpu.memory_space<smem>>
      %c3_i32_267 = arith.constant 3 : i32
      %575 = arith.shrsi %574, %c3_i32_267 : i32
      %c7_i32_268 = arith.constant 7 : i32
      %576 = arith.andi %574, %c7_i32_268 : i32
      %577 = arith.index_cast %575 : i32 to index
      %c0_269 = arith.constant 0 : index
      %c0_270 = arith.constant 0 : index
      %578 = vector.load %arg3[%577, %c0_269, %c0_270] : memref<64x8x4xf32, #tpu.memory_space<vmem>>, vector<1x8x4xf32>
      %579 = vector.shape_cast %578 : vector<1x8x4xf32> to vector<8x4xf32>
      %580 = vector.broadcast %576 : i32 to vector<8x4xi32>
      %581 = arith.cmpi eq, %1, %580 : vector<8x4xi32>
      %cst_271 = arith.constant 0.000000e+00 : f32
      %582 = vector.broadcast %cst_271 : f32 to vector<8x4xf32>
      %583 = arith.select %581, %579, %582 : vector<8x4xi1>, vector<8x4xf32>
      %cst_272 = arith.constant dense<0.000000e+00> : vector<4xf32>
      %584 = vector.multi_reduction <add>, %583, %cst_272 [0] : vector<8x4xf32> to vector<4xf32>
      %585 = vector.shape_cast %584 : vector<4xf32> to vector<1x4xf32>
      %c6_i32_273 = arith.constant 6 : i32
      %586 = vector.broadcast %c6_i32_273 : i32 to vector<8x4xi32>
      %587 = arith.cmpi eq, %1, %586 : vector<8x4xi32>
      %cst_274 = arith.constant 0.000000e+00 : f32
      %588 = vector.shape_cast %585 : vector<1x4xf32> to vector<1x4xf32>
      %589 = vector.broadcast %588 : vector<1x4xf32> to vector<8x4xf32>
      %590 = vector.broadcast %cst_274 : f32 to vector<8x4xf32>
      %591 = arith.select %587, %589, %590 : vector<8x4xi1>, vector<8x4xf32>
      %592 = arith.addf %567, %591 : vector<8x4xf32>
      %c8_i32_275 = arith.constant 8 : i32
      %593 = arith.muli %arg5, %c8_i32_275 : i32
      %594 = arith.addi %0, %593 : i32
      %c7_i32_276 = arith.constant 7 : i32
      %595 = arith.addi %594, %c7_i32_276 : i32
      %c4_i32_277 = arith.constant 4 : i32
      %596 = arith.muli %595, %c4_i32_277 : i32
      %c2_i32_278 = arith.constant 2 : i32
      %597 = arith.addi %596, %c2_i32_278 : i32
      %598 = arith.index_cast %597 : i32 to index
      %599 = memref.load %arg1[%598] : memref<64xi32, #tpu.memory_space<smem>>
      %c3_i32_279 = arith.constant 3 : i32
      %600 = arith.shrsi %599, %c3_i32_279 : i32
      %c7_i32_280 = arith.constant 7 : i32
      %601 = arith.andi %599, %c7_i32_280 : i32
      %602 = arith.index_cast %600 : i32 to index
      %c0_281 = arith.constant 0 : index
      %c0_282 = arith.constant 0 : index
      %603 = vector.load %arg3[%602, %c0_281, %c0_282] : memref<64x8x4xf32, #tpu.memory_space<vmem>>, vector<1x8x4xf32>
      %604 = vector.shape_cast %603 : vector<1x8x4xf32> to vector<8x4xf32>
      %605 = vector.broadcast %601 : i32 to vector<8x4xi32>
      %606 = arith.cmpi eq, %1, %605 : vector<8x4xi32>
      %cst_283 = arith.constant 0.000000e+00 : f32
      %607 = vector.broadcast %cst_283 : f32 to vector<8x4xf32>
      %608 = arith.select %606, %604, %607 : vector<8x4xi1>, vector<8x4xf32>
      %cst_284 = arith.constant dense<0.000000e+00> : vector<4xf32>
      %609 = vector.multi_reduction <add>, %608, %cst_284 [0] : vector<8x4xf32> to vector<4xf32>
      %610 = vector.shape_cast %609 : vector<4xf32> to vector<1x4xf32>
      %c7_i32_285 = arith.constant 7 : i32
      %611 = vector.broadcast %c7_i32_285 : i32 to vector<8x4xi32>
      %612 = arith.cmpi eq, %1, %611 : vector<8x4xi32>
      %cst_286 = arith.constant 0.000000e+00 : f32
      %613 = vector.shape_cast %610 : vector<1x4xf32> to vector<1x4xf32>
      %614 = vector.broadcast %613 : vector<1x4xf32> to vector<8x4xf32>
      %615 = vector.broadcast %cst_286 : f32 to vector<8x4xf32>
      %616 = arith.select %612, %614, %615 : vector<8x4xi1>, vector<8x4xf32>
      %617 = arith.addf %592, %616 : vector<8x4xf32>
      %618 = vector.extract_strided_slice %5 {offsets = [0, 2], sizes = [8, 1], strides = [1, 1]} : vector<8x4xf32> to vector<8x1xf32>
      %619 = vector.broadcast %618 : vector<8x1xf32> to vector<8x4xf32>
      %620 = arith.mulf %619, %617 : vector<8x4xf32>
      %621 = arith.addf %416, %620 : vector<8x4xf32>
      %cst_287 = arith.constant 0.000000e+00 : f32
      %622 = vector.broadcast %cst_287 : f32 to vector<8x4xf32>
      %c8_i32_288 = arith.constant 8 : i32
      %623 = arith.muli %arg5, %c8_i32_288 : i32
      %624 = arith.addi %0, %623 : i32
      %c0_i32_289 = arith.constant 0 : i32
      %625 = arith.addi %624, %c0_i32_289 : i32
      %c4_i32_290 = arith.constant 4 : i32
      %626 = arith.muli %625, %c4_i32_290 : i32
      %c3_i32_291 = arith.constant 3 : i32
      %627 = arith.addi %626, %c3_i32_291 : i32
      %628 = arith.index_cast %627 : i32 to index
      %629 = memref.load %arg1[%628] : memref<64xi32, #tpu.memory_space<smem>>
      %c3_i32_292 = arith.constant 3 : i32
      %630 = arith.shrsi %629, %c3_i32_292 : i32
      %c7_i32_293 = arith.constant 7 : i32
      %631 = arith.andi %629, %c7_i32_293 : i32
      %632 = arith.index_cast %630 : i32 to index
      %c0_294 = arith.constant 0 : index
      %c0_295 = arith.constant 0 : index
      %633 = vector.load %arg3[%632, %c0_294, %c0_295] : memref<64x8x4xf32, #tpu.memory_space<vmem>>, vector<1x8x4xf32>
      %634 = vector.shape_cast %633 : vector<1x8x4xf32> to vector<8x4xf32>
      %635 = vector.broadcast %631 : i32 to vector<8x4xi32>
      %636 = arith.cmpi eq, %1, %635 : vector<8x4xi32>
      %cst_296 = arith.constant 0.000000e+00 : f32
      %637 = vector.broadcast %cst_296 : f32 to vector<8x4xf32>
      %638 = arith.select %636, %634, %637 : vector<8x4xi1>, vector<8x4xf32>
      %cst_297 = arith.constant dense<0.000000e+00> : vector<4xf32>
      %639 = vector.multi_reduction <add>, %638, %cst_297 [0] : vector<8x4xf32> to vector<4xf32>
      %640 = vector.shape_cast %639 : vector<4xf32> to vector<1x4xf32>
      %c0_i32_298 = arith.constant 0 : i32
      %641 = vector.broadcast %c0_i32_298 : i32 to vector<8x4xi32>
      %642 = arith.cmpi eq, %1, %641 : vector<8x4xi32>
      %cst_299 = arith.constant 0.000000e+00 : f32
      %643 = vector.shape_cast %640 : vector<1x4xf32> to vector<1x4xf32>
      %644 = vector.broadcast %643 : vector<1x4xf32> to vector<8x4xf32>
      %645 = vector.broadcast %cst_299 : f32 to vector<8x4xf32>
      %646 = arith.select %642, %644, %645 : vector<8x4xi1>, vector<8x4xf32>
      %647 = arith.addf %622, %646 : vector<8x4xf32>
      %c8_i32_300 = arith.constant 8 : i32
      %648 = arith.muli %arg5, %c8_i32_300 : i32
      %649 = arith.addi %0, %648 : i32
      %c1_i32_301 = arith.constant 1 : i32
      %650 = arith.addi %649, %c1_i32_301 : i32
      %c4_i32_302 = arith.constant 4 : i32
      %651 = arith.muli %650, %c4_i32_302 : i32
      %c3_i32_303 = arith.constant 3 : i32
      %652 = arith.addi %651, %c3_i32_303 : i32
      %653 = arith.index_cast %652 : i32 to index
      %654 = memref.load %arg1[%653] : memref<64xi32, #tpu.memory_space<smem>>
      %c3_i32_304 = arith.constant 3 : i32
      %655 = arith.shrsi %654, %c3_i32_304 : i32
      %c7_i32_305 = arith.constant 7 : i32
      %656 = arith.andi %654, %c7_i32_305 : i32
      %657 = arith.index_cast %655 : i32 to index
      %c0_306 = arith.constant 0 : index
      %c0_307 = arith.constant 0 : index
      %658 = vector.load %arg3[%657, %c0_306, %c0_307] : memref<64x8x4xf32, #tpu.memory_space<vmem>>, vector<1x8x4xf32>
      %659 = vector.shape_cast %658 : vector<1x8x4xf32> to vector<8x4xf32>
      %660 = vector.broadcast %656 : i32 to vector<8x4xi32>
      %661 = arith.cmpi eq, %1, %660 : vector<8x4xi32>
      %cst_308 = arith.constant 0.000000e+00 : f32
      %662 = vector.broadcast %cst_308 : f32 to vector<8x4xf32>
      %663 = arith.select %661, %659, %662 : vector<8x4xi1>, vector<8x4xf32>
      %cst_309 = arith.constant dense<0.000000e+00> : vector<4xf32>
      %664 = vector.multi_reduction <add>, %663, %cst_309 [0] : vector<8x4xf32> to vector<4xf32>
      %665 = vector.shape_cast %664 : vector<4xf32> to vector<1x4xf32>
      %c1_i32_310 = arith.constant 1 : i32
      %666 = vector.broadcast %c1_i32_310 : i32 to vector<8x4xi32>
      %667 = arith.cmpi eq, %1, %666 : vector<8x4xi32>
      %cst_311 = arith.constant 0.000000e+00 : f32
      %668 = vector.shape_cast %665 : vector<1x4xf32> to vector<1x4xf32>
      %669 = vector.broadcast %668 : vector<1x4xf32> to vector<8x4xf32>
      %670 = vector.broadcast %cst_311 : f32 to vector<8x4xf32>
      %671 = arith.select %667, %669, %670 : vector<8x4xi1>, vector<8x4xf32>
      %672 = arith.addf %647, %671 : vector<8x4xf32>
      %c8_i32_312 = arith.constant 8 : i32
      %673 = arith.muli %arg5, %c8_i32_312 : i32
      %674 = arith.addi %0, %673 : i32
      %c2_i32_313 = arith.constant 2 : i32
      %675 = arith.addi %674, %c2_i32_313 : i32
      %c4_i32_314 = arith.constant 4 : i32
      %676 = arith.muli %675, %c4_i32_314 : i32
      %c3_i32_315 = arith.constant 3 : i32
      %677 = arith.addi %676, %c3_i32_315 : i32
      %678 = arith.index_cast %677 : i32 to index
      %679 = memref.load %arg1[%678] : memref<64xi32, #tpu.memory_space<smem>>
      %c3_i32_316 = arith.constant 3 : i32
      %680 = arith.shrsi %679, %c3_i32_316 : i32
      %c7_i32_317 = arith.constant 7 : i32
      %681 = arith.andi %679, %c7_i32_317 : i32
      %682 = arith.index_cast %680 : i32 to index
      %c0_318 = arith.constant 0 : index
      %c0_319 = arith.constant 0 : index
      %683 = vector.load %arg3[%682, %c0_318, %c0_319] : memref<64x8x4xf32, #tpu.memory_space<vmem>>, vector<1x8x4xf32>
      %684 = vector.shape_cast %683 : vector<1x8x4xf32> to vector<8x4xf32>
      %685 = vector.broadcast %681 : i32 to vector<8x4xi32>
      %686 = arith.cmpi eq, %1, %685 : vector<8x4xi32>
      %cst_320 = arith.constant 0.000000e+00 : f32
      %687 = vector.broadcast %cst_320 : f32 to vector<8x4xf32>
      %688 = arith.select %686, %684, %687 : vector<8x4xi1>, vector<8x4xf32>
      %cst_321 = arith.constant dense<0.000000e+00> : vector<4xf32>
      %689 = vector.multi_reduction <add>, %688, %cst_321 [0] : vector<8x4xf32> to vector<4xf32>
      %690 = vector.shape_cast %689 : vector<4xf32> to vector<1x4xf32>
      %c2_i32_322 = arith.constant 2 : i32
      %691 = vector.broadcast %c2_i32_322 : i32 to vector<8x4xi32>
      %692 = arith.cmpi eq, %1, %691 : vector<8x4xi32>
      %cst_323 = arith.constant 0.000000e+00 : f32
      %693 = vector.shape_cast %690 : vector<1x4xf32> to vector<1x4xf32>
      %694 = vector.broadcast %693 : vector<1x4xf32> to vector<8x4xf32>
      %695 = vector.broadcast %cst_323 : f32 to vector<8x4xf32>
      %696 = arith.select %692, %694, %695 : vector<8x4xi1>, vector<8x4xf32>
      %697 = arith.addf %672, %696 : vector<8x4xf32>
      %c8_i32_324 = arith.constant 8 : i32
      %698 = arith.muli %arg5, %c8_i32_324 : i32
      %699 = arith.addi %0, %698 : i32
      %c3_i32_325 = arith.constant 3 : i32
      %700 = arith.addi %699, %c3_i32_325 : i32
      %c4_i32_326 = arith.constant 4 : i32
      %701 = arith.muli %700, %c4_i32_326 : i32
      %c3_i32_327 = arith.constant 3 : i32
      %702 = arith.addi %701, %c3_i32_327 : i32
      %703 = arith.index_cast %702 : i32 to index
      %704 = memref.load %arg1[%703] : memref<64xi32, #tpu.memory_space<smem>>
      %c3_i32_328 = arith.constant 3 : i32
      %705 = arith.shrsi %704, %c3_i32_328 : i32
      %c7_i32_329 = arith.constant 7 : i32
      %706 = arith.andi %704, %c7_i32_329 : i32
      %707 = arith.index_cast %705 : i32 to index
      %c0_330 = arith.constant 0 : index
      %c0_331 = arith.constant 0 : index
      %708 = vector.load %arg3[%707, %c0_330, %c0_331] : memref<64x8x4xf32, #tpu.memory_space<vmem>>, vector<1x8x4xf32>
      %709 = vector.shape_cast %708 : vector<1x8x4xf32> to vector<8x4xf32>
      %710 = vector.broadcast %706 : i32 to vector<8x4xi32>
      %711 = arith.cmpi eq, %1, %710 : vector<8x4xi32>
      %cst_332 = arith.constant 0.000000e+00 : f32
      %712 = vector.broadcast %cst_332 : f32 to vector<8x4xf32>
      %713 = arith.select %711, %709, %712 : vector<8x4xi1>, vector<8x4xf32>
      %cst_333 = arith.constant dense<0.000000e+00> : vector<4xf32>
      %714 = vector.multi_reduction <add>, %713, %cst_333 [0] : vector<8x4xf32> to vector<4xf32>
      %715 = vector.shape_cast %714 : vector<4xf32> to vector<1x4xf32>
      %c3_i32_334 = arith.constant 3 : i32
      %716 = vector.broadcast %c3_i32_334 : i32 to vector<8x4xi32>
      %717 = arith.cmpi eq, %1, %716 : vector<8x4xi32>
      %cst_335 = arith.constant 0.000000e+00 : f32
      %718 = vector.shape_cast %715 : vector<1x4xf32> to vector<1x4xf32>
      %719 = vector.broadcast %718 : vector<1x4xf32> to vector<8x4xf32>
      %720 = vector.broadcast %cst_335 : f32 to vector<8x4xf32>
      %721 = arith.select %717, %719, %720 : vector<8x4xi1>, vector<8x4xf32>
      %722 = arith.addf %697, %721 : vector<8x4xf32>
      %c8_i32_336 = arith.constant 8 : i32
      %723 = arith.muli %arg5, %c8_i32_336 : i32
      %724 = arith.addi %0, %723 : i32
      %c4_i32_337 = arith.constant 4 : i32
      %725 = arith.addi %724, %c4_i32_337 : i32
      %c4_i32_338 = arith.constant 4 : i32
      %726 = arith.muli %725, %c4_i32_338 : i32
      %c3_i32_339 = arith.constant 3 : i32
      %727 = arith.addi %726, %c3_i32_339 : i32
      %728 = arith.index_cast %727 : i32 to index
      %729 = memref.load %arg1[%728] : memref<64xi32, #tpu.memory_space<smem>>
      %c3_i32_340 = arith.constant 3 : i32
      %730 = arith.shrsi %729, %c3_i32_340 : i32
      %c7_i32_341 = arith.constant 7 : i32
      %731 = arith.andi %729, %c7_i32_341 : i32
      %732 = arith.index_cast %730 : i32 to index
      %c0_342 = arith.constant 0 : index
      %c0_343 = arith.constant 0 : index
      %733 = vector.load %arg3[%732, %c0_342, %c0_343] : memref<64x8x4xf32, #tpu.memory_space<vmem>>, vector<1x8x4xf32>
      %734 = vector.shape_cast %733 : vector<1x8x4xf32> to vector<8x4xf32>
      %735 = vector.broadcast %731 : i32 to vector<8x4xi32>
      %736 = arith.cmpi eq, %1, %735 : vector<8x4xi32>
      %cst_344 = arith.constant 0.000000e+00 : f32
      %737 = vector.broadcast %cst_344 : f32 to vector<8x4xf32>
      %738 = arith.select %736, %734, %737 : vector<8x4xi1>, vector<8x4xf32>
      %cst_345 = arith.constant dense<0.000000e+00> : vector<4xf32>
      %739 = vector.multi_reduction <add>, %738, %cst_345 [0] : vector<8x4xf32> to vector<4xf32>
      %740 = vector.shape_cast %739 : vector<4xf32> to vector<1x4xf32>
      %c4_i32_346 = arith.constant 4 : i32
      %741 = vector.broadcast %c4_i32_346 : i32 to vector<8x4xi32>
      %742 = arith.cmpi eq, %1, %741 : vector<8x4xi32>
      %cst_347 = arith.constant 0.000000e+00 : f32
      %743 = vector.shape_cast %740 : vector<1x4xf32> to vector<1x4xf32>
      %744 = vector.broadcast %743 : vector<1x4xf32> to vector<8x4xf32>
      %745 = vector.broadcast %cst_347 : f32 to vector<8x4xf32>
      %746 = arith.select %742, %744, %745 : vector<8x4xi1>, vector<8x4xf32>
      %747 = arith.addf %722, %746 : vector<8x4xf32>
      %c8_i32_348 = arith.constant 8 : i32
      %748 = arith.muli %arg5, %c8_i32_348 : i32
      %749 = arith.addi %0, %748 : i32
      %c5_i32_349 = arith.constant 5 : i32
      %750 = arith.addi %749, %c5_i32_349 : i32
      %c4_i32_350 = arith.constant 4 : i32
      %751 = arith.muli %750, %c4_i32_350 : i32
      %c3_i32_351 = arith.constant 3 : i32
      %752 = arith.addi %751, %c3_i32_351 : i32
      %753 = arith.index_cast %752 : i32 to index
      %754 = memref.load %arg1[%753] : memref<64xi32, #tpu.memory_space<smem>>
      %c3_i32_352 = arith.constant 3 : i32
      %755 = arith.shrsi %754, %c3_i32_352 : i32
      %c7_i32_353 = arith.constant 7 : i32
      %756 = arith.andi %754, %c7_i32_353 : i32
      %757 = arith.index_cast %755 : i32 to index
      %c0_354 = arith.constant 0 : index
      %c0_355 = arith.constant 0 : index
      %758 = vector.load %arg3[%757, %c0_354, %c0_355] : memref<64x8x4xf32, #tpu.memory_space<vmem>>, vector<1x8x4xf32>
      %759 = vector.shape_cast %758 : vector<1x8x4xf32> to vector<8x4xf32>
      %760 = vector.broadcast %756 : i32 to vector<8x4xi32>
      %761 = arith.cmpi eq, %1, %760 : vector<8x4xi32>
      %cst_356 = arith.constant 0.000000e+00 : f32
      %762 = vector.broadcast %cst_356 : f32 to vector<8x4xf32>
      %763 = arith.select %761, %759, %762 : vector<8x4xi1>, vector<8x4xf32>
      %cst_357 = arith.constant dense<0.000000e+00> : vector<4xf32>
      %764 = vector.multi_reduction <add>, %763, %cst_357 [0] : vector<8x4xf32> to vector<4xf32>
      %765 = vector.shape_cast %764 : vector<4xf32> to vector<1x4xf32>
      %c5_i32_358 = arith.constant 5 : i32
      %766 = vector.broadcast %c5_i32_358 : i32 to vector<8x4xi32>
      %767 = arith.cmpi eq, %1, %766 : vector<8x4xi32>
      %cst_359 = arith.constant 0.000000e+00 : f32
      %768 = vector.shape_cast %765 : vector<1x4xf32> to vector<1x4xf32>
      %769 = vector.broadcast %768 : vector<1x4xf32> to vector<8x4xf32>
      %770 = vector.broadcast %cst_359 : f32 to vector<8x4xf32>
      %771 = arith.select %767, %769, %770 : vector<8x4xi1>, vector<8x4xf32>
      %772 = arith.addf %747, %771 : vector<8x4xf32>
      %c8_i32_360 = arith.constant 8 : i32
      %773 = arith.muli %arg5, %c8_i32_360 : i32
      %774 = arith.addi %0, %773 : i32
      %c6_i32_361 = arith.constant 6 : i32
      %775 = arith.addi %774, %c6_i32_361 : i32
      %c4_i32_362 = arith.constant 4 : i32
      %776 = arith.muli %775, %c4_i32_362 : i32
      %c3_i32_363 = arith.constant 3 : i32
      %777 = arith.addi %776, %c3_i32_363 : i32
      %778 = arith.index_cast %777 : i32 to index
      %779 = memref.load %arg1[%778] : memref<64xi32, #tpu.memory_space<smem>>
      %c3_i32_364 = arith.constant 3 : i32
      %780 = arith.shrsi %779, %c3_i32_364 : i32
      %c7_i32_365 = arith.constant 7 : i32
      %781 = arith.andi %779, %c7_i32_365 : i32
      %782 = arith.index_cast %780 : i32 to index
      %c0_366 = arith.constant 0 : index
      %c0_367 = arith.constant 0 : index
      %783 = vector.load %arg3[%782, %c0_366, %c0_367] : memref<64x8x4xf32, #tpu.memory_space<vmem>>, vector<1x8x4xf32>
      %784 = vector.shape_cast %783 : vector<1x8x4xf32> to vector<8x4xf32>
      %785 = vector.broadcast %781 : i32 to vector<8x4xi32>
      %786 = arith.cmpi eq, %1, %785 : vector<8x4xi32>
      %cst_368 = arith.constant 0.000000e+00 : f32
      %787 = vector.broadcast %cst_368 : f32 to vector<8x4xf32>
      %788 = arith.select %786, %784, %787 : vector<8x4xi1>, vector<8x4xf32>
      %cst_369 = arith.constant dense<0.000000e+00> : vector<4xf32>
      %789 = vector.multi_reduction <add>, %788, %cst_369 [0] : vector<8x4xf32> to vector<4xf32>
      %790 = vector.shape_cast %789 : vector<4xf32> to vector<1x4xf32>
      %c6_i32_370 = arith.constant 6 : i32
      %791 = vector.broadcast %c6_i32_370 : i32 to vector<8x4xi32>
      %792 = arith.cmpi eq, %1, %791 : vector<8x4xi32>
      %cst_371 = arith.constant 0.000000e+00 : f32
      %793 = vector.shape_cast %790 : vector<1x4xf32> to vector<1x4xf32>
      %794 = vector.broadcast %793 : vector<1x4xf32> to vector<8x4xf32>
      %795 = vector.broadcast %cst_371 : f32 to vector<8x4xf32>
      %796 = arith.select %792, %794, %795 : vector<8x4xi1>, vector<8x4xf32>
      %797 = arith.addf %772, %796 : vector<8x4xf32>
      %c8_i32_372 = arith.constant 8 : i32
      %798 = arith.muli %arg5, %c8_i32_372 : i32
      %799 = arith.addi %0, %798 : i32
      %c7_i32_373 = arith.constant 7 : i32
      %800 = arith.addi %799, %c7_i32_373 : i32
      %c4_i32_374 = arith.constant 4 : i32
      %801 = arith.muli %800, %c4_i32_374 : i32
      %c3_i32_375 = arith.constant 3 : i32
      %802 = arith.addi %801, %c3_i32_375 : i32
      %803 = arith.index_cast %802 : i32 to index
      %804 = memref.load %arg1[%803] : memref<64xi32, #tpu.memory_space<smem>>
      %c3_i32_376 = arith.constant 3 : i32
      %805 = arith.shrsi %804, %c3_i32_376 : i32
      %c7_i32_377 = arith.constant 7 : i32
      %806 = arith.andi %804, %c7_i32_377 : i32
      %807 = arith.index_cast %805 : i32 to index
      %c0_378 = arith.constant 0 : index
      %c0_379 = arith.constant 0 : index
      %808 = vector.load %arg3[%807, %c0_378, %c0_379] : memref<64x8x4xf32, #tpu.memory_space<vmem>>, vector<1x8x4xf32>
      %809 = vector.shape_cast %808 : vector<1x8x4xf32> to vector<8x4xf32>
      %810 = vector.broadcast %806 : i32 to vector<8x4xi32>
      %811 = arith.cmpi eq, %1, %810 : vector<8x4xi32>
      %cst_380 = arith.constant 0.000000e+00 : f32
      %812 = vector.broadcast %cst_380 : f32 to vector<8x4xf32>
      %813 = arith.select %811, %809, %812 : vector<8x4xi1>, vector<8x4xf32>
      %cst_381 = arith.constant dense<0.000000e+00> : vector<4xf32>
      %814 = vector.multi_reduction <add>, %813, %cst_381 [0] : vector<8x4xf32> to vector<4xf32>
      %815 = vector.shape_cast %814 : vector<4xf32> to vector<1x4xf32>
      %c7_i32_382 = arith.constant 7 : i32
      %816 = vector.broadcast %c7_i32_382 : i32 to vector<8x4xi32>
      %817 = arith.cmpi eq, %1, %816 : vector<8x4xi32>
      %cst_383 = arith.constant 0.000000e+00 : f32
      %818 = vector.shape_cast %815 : vector<1x4xf32> to vector<1x4xf32>
      %819 = vector.broadcast %818 : vector<1x4xf32> to vector<8x4xf32>
      %820 = vector.broadcast %cst_383 : f32 to vector<8x4xf32>
      %821 = arith.select %817, %819, %820 : vector<8x4xi1>, vector<8x4xf32>
      %822 = arith.addf %797, %821 : vector<8x4xf32>
      %823 = vector.extract_strided_slice %5 {offsets = [0, 3], sizes = [8, 1], strides = [1, 1]} : vector<8x4xf32> to vector<8x1xf32>
      %824 = vector.broadcast %823 : vector<8x1xf32> to vector<8x4xf32>
      %825 = arith.mulf %824, %822 : vector<8x4xf32>
      %826 = arith.addf %621, %825 : vector<8x4xf32>
      %827 = arith.index_cast %arg5 : i32 to index
      %c0_384 = arith.constant 0 : index
      %c0_385 = arith.constant 0 : index
      %828 = vector.load %arg4[%827, %c0_384, %c0_385] : memref<2x8x4xf32, #tpu.memory_space<vmem>>, vector<1x8x4xf32>
      %829 = vector.shape_cast %828 : vector<1x8x4xf32> to vector<8x4xf32>
      %830 = vector.shape_cast %826 : vector<8x4xf32> to vector<1x8x4xf32>
      tpu.vector_store %arg4[%827, %c0_384, %c0_385], %830 {strides = array<i32>} : memref<2x8x4xf32, #tpu.memory_space<vmem>>, vector<1x8x4xf32>,
    }
    %c2_i32_0 = arith.constant 2 : i32
    return
  }
  func.func @transform_0(%arg0: i32, %arg1: memref<64xi32, #tpu.memory_space<smem>>) -> (i32, i32, i32) {
    %c0_i32 = arith.constant 0 : i32
    %c0_i32_0 = arith.constant 0 : i32
    %c0_i32_1 = arith.constant 0 : i32
    return %arg0, %c0_i32, %c0_i32_0 : i32, i32, i32
  }
  func.func @transform_1(%arg0: i32, %arg1: memref<64xi32, #tpu.memory_space<smem>>) -> (i32, i32, i32) {
    %c0_i32 = arith.constant 0 : i32
    %c0_i32_0 = arith.constant 0 : i32
    %c0_i32_1 = arith.constant 0 : i32
    %c0_i32_2 = arith.constant 0 : i32
    return %c0_i32, %c0_i32_0, %c0_i32_1 : i32, i32, i32
  }
  func.func @transform_2(%arg0: i32, %arg1: memref<64xi32, #tpu.memory_space<smem>>) -> (i32, i32, i32) {
    %c0_i32 = arith.constant 0 : i32
    %c0_i32_0 = arith.constant 0 : i32
    %c0_i32_1 = arith.constant 0 : i32
    return %arg0, %c0_i32, %c0_i32_0 : i32, i32, i32
  }
}

</mosaic_0001>

<llo_original>
// kernel: tpu_custom_call.1
$region0: #{tpu_custom_call.1}
  #allocation0 [shape = 'u32[]', space=smem, size = 0x4, offset = 0x4, fixed_abs, tag = 'smem constant byte address 0x4 - core index']
  #allocation1 [shape = 'u32[72,128]{1,0:T(1,128)}', space=vmem, size = 0x9000, scoped, tag = 'internal scratch']
  #allocation2 [shape = 's32[1]{0}', space=sflag, size = 0x4, scoped, tag = 'scoped memory for tpu_custom_call.1']
  #allocation3 [shape = 'u8[512]{0}', space=smem, size = 0x200, scoped, tag = 'prefetched SMEM operand 0']
  %s0 = inlined_call_operand.vmem [shape: s32[64], index: 0, kind: input, shape index: {}]
  %s1 = inlined_call_operand.vmem [shape: f32[2,8,4], index: 1, kind: input, shape index: {}]
  %s2 = inlined_call_operand.vmem [shape: f32[64,8,4], index: 2, kind: input, shape index: {}]
  %s3 = inlined_call_operand.vmem [shape: f32[2,8,4], index: 3, kind: output, shape index: {}]
  %s4 = sld [smem:[#allocation0]]
  $region25: #{tpu_custom_call.1} parent=0
    _
  %s6 = ssub.s32 1, %s4
  %s7 = scalar_select 0, %s6, %s4
  %s9 = sshll.u32 %s0, 4
  %s10 = int_to_ptr.vmem [resolvable:$true] %s9
  %12 = dma.vmem_to_smem %s10, 16, [#allocation3], [#allocation2]
  %14 = dma.done [#allocation2], 16
  %15 = sfence
  // Predicated region
  $region2: #{tpu_custom_call.1} parent=0 // pred_check
    _
  $region3: #{tpu_custom_call.1} parent=0 // pred_check_branch
    %17 = sbr.rel (0) target = $region5
  $region4: #{tpu_custom_call.1} parent=0 // pred_region
    _
  $region5: #{tpu_custom_call.1} parent=0 // pred_fallthru
    _
  // Predicated region
  $region6: #{tpu_custom_call.1} parent=0 // pred_check
    _
  $region7: #{tpu_custom_call.1} parent=0 // pred_check_branch
    %19 = sbr.rel (0) target = $region9
  $region8: #{tpu_custom_call.1} parent=0 // pred_region
    _
  $region9: #{tpu_custom_call.1} parent=0 // pred_fallthru
    _
  %s20 = smul.u32 0, 16
  %v21 = vlaneseq
  %v22 = vshrl.u32 %v21, 7
  loop: start=0, step=1, limit=2
  $region10: #{tpu_custom_call.1} parent=0 // loop_pre_header
    _
  $region11: #{tpu_custom_call.1} parent=0 // loop_header
    %s24 = sphi 0, %s28
    %p25 = scmp.ge.s32.totalorder %s24, 2
  $region12: #{tpu_custom_call.1} parent=0 // loop_header_branch
    %27 = sbr.rel (%p25) target = $region16
  $region13: #{tpu_custom_call.1} parent=0 // loop_body
    %s29 = smul.u32 %s24, 8
    %s30 = scalar_lea.vmem %s1, %s29
    %v31 = vld [vmem:[%s30] sm:$0xff]
    %s32 = sadd.s32 %s20, %s29
    %s33 = smul.u32 %s32, 4
    %s34 = sld [smem:[#allocation3 + %s33]]
    %s35 = sshra.s32 %s34, 3
    %s36 = sand.u32 %s34, 7
    %s37 = smul.u32 %s35, 8
    %s38 = scalar_lea.vmem %s2, %s37
    %v39 = vld [vmem:[%s38] sm:$0xff]
    %v40 = vstv %s36
    %vm41 = vcmp.eq.s32.totalorder %v22, %v40
    %v42 = vsel %vm41, %v39, 0.0
    %vm43 = vcmask 31744
    %v44 = vsel %vm43, %v42, 0.0
    %v45 = vrot.slane %v44, 4
    %v46 = vadd.f32 %v44, %v45
    %v47 = vrot.slane %v46, 2
    %v48 = vadd.f32 %v46, %v47
    %v49 = vrot.slane %v48, 1
    %v50 = vadd.f32 %v48, %v49
    %vm51 = vcmp.eq.s32.totalorder %v22, 0
    %v52 = vsel %vm51, %v50, 0.0
    %v53 = vadd.f32 %v52, 0.0
    %s54 = sadd.s32 %s32, 1
    %s55 = smul.u32 %s54, 4
    %s56 = sld [smem:[#allocation3 + %s55]]
    %s57 = sshra.s32 %s56, 3
    %s58 = sand.u32 %s56, 7
    %s59 = smul.u32 %s57, 8
    %s60 = scalar_lea.vmem %s2, %s59
    %v61 = vld [vmem:[%s60] sm:$0xff]
    %v62 = vstv %s58
    %vm63 = vcmp.eq.s32.totalorder %v22, %v62
    %v64 = vsel %vm63, %v61, 0.0
    %v65 = vsel %vm43, %v64, 0.0
    %v66 = vrot.slane %v65, 4
    %v67 = vadd.f32 %v65, %v66
    %v68 = vrot.slane %v67, 2
    %v69 = vadd.f32 %v67, %v68
    %v70 = vrot.slane %v69, 1
    %v71 = vadd.f32 %v69, %v70
    %vm72 = vcmp.eq.s32.totalorder %v22, 1
    %v73 = vsel %vm72, %v71, 0.0
    %v74 = vadd.f32 %v53, %v73
    %s75 = sadd.s32 %s32, 2
    %s76 = smul.u32 %s75, 4
    %s77 = sld [smem:[#allocation3 + %s76]]
    %s78 = sshra.s32 %s77, 3
    %s79 = sand.u32 %s77, 7
    %s80 = smul.u32 %s78, 8
    %s81 = scalar_lea.vmem %s2, %s80
    %v82 = vld [vmem:[%s81] sm:$0xff]
    %v83 = vstv %s79
    %vm84 = vcmp.eq.s32.totalorder %v22, %v83
    %v85 = vsel %vm84, %v82, 0.0
    %v86 = vsel %vm43, %v85, 0.0
    %v87 = vrot.slane %v86, 4
    %v88 = vadd.f32 %v86, %v87
    %v89 = vrot.slane %v88, 2
    %v90 = vadd.f32 %v88, %v89
    %v91 = vrot.slane %v90, 1
    %v92 = vadd.f32 %v90, %v91
    %vm93 = vcmp.eq.s32.totalorder %v22, 2
    %v94 = vsel %vm93, %v92, 0.0
    %v95 = vadd.f32 %v74, %v94
    %s96 = sadd.s32 %s32, 3
    %s97 = smul.u32 %s96, 4
    %s98 = sld [smem:[#allocation3 + %s97]]
    %s99 = sshra.s32 %s98, 3
    %s100 = sand.u32 %s98, 7
    %s101 = smul.u32 %s99, 8
    %s102 = scalar_lea.vmem %s2, %s101
    %v103 = vld [vmem:[%s102] sm:$0xff]
    %v104 = vstv %s100
    %vm105 = vcmp.eq.s32.totalorder %v22, %v104
    %v106 = vsel %vm105, %v103, 0.0
    %v107 = vsel %vm43, %v106, 0.0
    %v108 = vrot.slane %v107, 4
    %v109 = vadd.f32 %v107, %v108
    %v110 = vrot.slane %v109, 2
    %v111 = vadd.f32 %v109, %v110
    %v112 = vrot.slane %v111, 1
    %v113 = vadd.f32 %v111, %v112
    %vm114 = vcmp.eq.s32.totalorder %v22, 3
    %v115 = vsel %vm114, %v113, 0.0
    %v116 = vadd.f32 %v95, %v115
    %s117 = sadd.s32 %s32, 4
    %s118 = smul.u32 %s117, 4
    %s119 = sld [smem:[#allocation3 + %s118]]
    %s120 = sshra.s32 %s119, 3
    %s121 = sand.u32 %s119, 7
    %s122 = smul.u32 %s120, 8
    %s123 = scalar_lea.vmem %s2, %s122
    %v124 = vld [vmem:[%s123] sm:$0xff]
    %v125 = vstv %s121
    %vm126 = vcmp.eq.s32.totalorder %v22, %v125
    %v127 = vsel %vm126, %v124, 0.0
    %v128 = vsel %vm43, %v127, 0.0
    %v129 = vrot.slane %v128, 4
    %v130 = vadd.f32 %v128, %v129
    %v131 = vrot.slane %v130, 2
    %v132 = vadd.f32 %v130, %v131
    %v133 = vrot.slane %v132, 1
    %v134 = vadd.f32 %v132, %v133
    %vm135 = vcmp.eq.s32.totalorder %v22, 4
    %v136 = vsel %vm135, %v134, 0.0
    %v137 = vadd.f32 %v116, %v136
    %s138 = sadd.s32 %s32, 5
    %s139 = smul.u32 %s138, 4
    %s140 = sld [smem:[#allocation3 + %s139]]
    %s141 = sshra.s32 %s140, 3
    %s142 = sand.u32 %s140, 7
    %s143 = smul.u32 %s141, 8
    %s144 = scalar_lea.vmem %s2, %s143
    %v145 = vld [vmem:[%s144] sm:$0xff]
    %v146 = vstv %s142
    %vm147 = vcmp.eq.s32.totalorder %v22, %v146
    %v148 = vsel %vm147, %v145, 0.0
    %v149 = vsel %vm43, %v148, 0.0
    %v150 = vrot.slane %v149, 4
    %v151 = vadd.f32 %v149, %v150
    %v152 = vrot.slane %v151, 2
    %v153 = vadd.f32 %v151, %v152
    %v154 = vrot.slane %v153, 1
    %v155 = vadd.f32 %v153, %v154
    %vm156 = vcmp.eq.s32.totalorder %v22, 5
    %v157 = vsel %vm156, %v155, 0.0
    %v158 = vadd.f32 %v137, %v157
    %s159 = sadd.s32 %s32, 6
    %s160 = smul.u32 %s159, 4
    %s161 = sld [smem:[#allocation3 + %s160]]
    %s162 = sshra.s32 %s161, 3
    %s163 = sand.u32 %s161, 7
    %s164 = smul.u32 %s162, 8
    %s165 = scalar_lea.vmem %s2, %s164
    %v166 = vld [vmem:[%s165] sm:$0xff]
    %v167 = vstv %s163
    %vm168 = vcmp.eq.s32.totalorder %v22, %v167
    %v169 = vsel %vm168, %v166, 0.0
    %v170 = vsel %vm43, %v169, 0.0
    %v171 = vrot.slane %v170, 4
    %v172 = vadd.f32 %v170, %v171
    %v173 = vrot.slane %v172, 2
    %v174 = vadd.f32 %v172, %v173
    %v175 = vrot.slane %v174, 1
    %v176 = vadd.f32 %v174, %v175
    %vm177 = vcmp.eq.s32.totalorder %v22, 6
    %v178 = vsel %vm177, %v176, 0.0
    %v179 = vadd.f32 %v158, %v178
    %s180 = sadd.s32 %s32, 7
    %s181 = smul.u32 %s180, 4
    %s182 = sld [smem:[#allocation3 + %s181]]
    %s183 = sshra.s32 %s182, 3
    %s184 = sand.u32 %s182, 7
    %s185 = smul.u32 %s183, 8
    %s186 = scalar_lea.vmem %s2, %s185
    %v187 = vld [vmem:[%s186] sm:$0xff]
    %v188 = vstv %s184
    %vm189 = vcmp.eq.s32.totalorder %v22, %v188
    %v190 = vsel %vm189, %v187, 0.0
    %v191 = vsel %vm43, %v190, 0.0
    %v192 = vrot.slane %v191, 4
    %v193 = vadd.f32 %v191, %v192
    %v194 = vrot.slane %v193, 2
    %v195 = vadd.f32 %v193, %v194
    %v196 = vrot.slane %v195, 1
    %v197 = vadd.f32 %v195, %v196
    %vm198 = vcmp.eq.s32.totalorder %v22, 7
    %v199 = vsel %vm198, %v197, 0.0
    %v200 = vadd.f32 %v179, %v199
    %202 = vset.pattern.permute.xlu0 0
    %203 = vperm.xlu0 %202, %v31
    %v204 = vpop.permute.xlu0 %203
    %v206 = vmul.f32 %v204, %v200
    %v207 = vadd.f32 %v206, 0.0
    %s208 = sadd.s32 %s33, 1
    %s209 = sld [smem:[#allocation3 + %s208]]
    %s210 = sshra.s32 %s209, 3
    %s211 = sand.u32 %s209, 7
    %s212 = smul.u32 %s210, 8
    %s213 = scalar_lea.vmem %s2, %s212
    %v214 = vld [vmem:[%s213] sm:$0xff]
    %v215 = vstv %s211
    %vm216 = vcmp.eq.s32.totalorder %v22, %v215
    %v217 = vsel %vm216, %v214, 0.0
    %v218 = vsel %vm43, %v217, 0.0
    %v219 = vrot.slane %v218, 4
    %v220 = vadd.f32 %v218, %v219
    %v221 = vrot.slane %v220, 2
    %v222 = vadd.f32 %v220, %v221
    %v223 = vrot.slane %v222, 1
    %v224 = vadd.f32 %v222, %v223
    %v225 = vsel %vm51, %v224, 0.0
    %v226 = vadd.f32 %v225, 0.0
    %s227 = sadd.s32 %s55, 1
    %s228 = sld [smem:[#allocation3 + %s227]]
    %s229 = sshra.s32 %s228, 3
    %s230 = sand.u32 %s228, 7
    %s231 = smul.u32 %s229, 8
    %s232 = scalar_lea.vmem %s2, %s231
    %v233 = vld [vmem:[%s232] sm:$0xff]
    %v234 = vstv %s230
    %vm235 = vcmp.eq.s32.totalorder %v22, %v234
    %v236 = vsel %vm235, %v233, 0.0
    %v237 = vsel %vm43, %v236, 0.0
    %v238 = vrot.slane %v237, 4
    %v239 = vadd.f32 %v237, %v238
    %v240 = vrot.slane %v239, 2
    %v241 = vadd.f32 %v239, %v240
    %v242 = vrot.slane %v241, 1
    %v243 = vadd.f32 %v241, %v242
    %v244 = vsel %vm72, %v243, 0.0
    %v245 = vadd.f32 %v226, %v244
    %s246 = sadd.s32 %s76, 1
    %s247 = sld [smem:[#allocation3 + %s246]]
    %s248 = sshra.s32 %s247, 3
    %s249 = sand.u32 %s247, 7
    %s250 = smul.u32 %s248, 8
    %s251 = scalar_lea.vmem %s2, %s250
    %v252 = vld [vmem:[%s251] sm:$0xff]
    %v253 = vstv %s249
    %vm254 = vcmp.eq.s32.totalorder %v22, %v253
    %v255 = vsel %vm254, %v252, 0.0
    %v256 = vsel %vm43, %v255, 0.0
    %v257 = vrot.slane %v256, 4
    %v258 = vadd.f32 %v256, %v257
    %v259 = vrot.slane %v258, 2
    %v260 = vadd.f32 %v258, %v259
    %v261 = vrot.slane %v260, 1
    %v262 = vadd.f32 %v260, %v261
    %v263 = vsel %vm93, %v262, 0.0
    %v264 = vadd.f32 %v245, %v263
    %s265 = sadd.s32 %s97, 1
    %s266 = sld [smem:[#allocation3 + %s265]]
    %s267 = sshra.s32 %s266, 3
    %s268 = sand.u32 %s266, 7
    %s269 = smul.u32 %s267, 8
    %s270 = scalar_lea.vmem %s2, %s269
    %v271 = vld [vmem:[%s270] sm:$0xff]
    %v272 = vstv %s268
    %vm273 = vcmp.eq.s32.totalorder %v22, %v272
    %v274 = vsel %vm273, %v271, 0.0
    %v275 = vsel %vm43, %v274, 0.0
    %v276 = vrot.slane %v275, 4
    %v277 = vadd.f32 %v275, %v276
    %v278 = vrot.slane %v277, 2
    %v279 = vadd.f32 %v277, %v278
    %v280 = vrot.slane %v279, 1
    %v281 = vadd.f32 %v279, %v280
    %v282 = vsel %vm114, %v281, 0.0
    %v283 = vadd.f32 %v264, %v282
    %s284 = sadd.s32 %s118, 1
    %s285 = sld [smem:[#allocation3 + %s284]]
    %s286 = sshra.s32 %s285, 3
    %s287 = sand.u32 %s285, 7
    %s288 = smul.u32 %s286, 8
    %s289 = scalar_lea.vmem %s2, %s288
    %v290 = vld [vmem:[%s289] sm:$0xff]
    %v291 = vstv %s287
    %vm292 = vcmp.eq.s32.totalorder %v22, %v291
    %v293 = vsel %vm292, %v290, 0.0
    %v294 = vsel %vm43, %v293, 0.0
    %v295 = vrot.slane %v294, 4
    %v296 = vadd.f32 %v294, %v295
    %v297 = vrot.slane %v296, 2
    %v298 = vadd.f32 %v296, %v297
    %v299 = vrot.slane %v298, 1
    %v300 = vadd.f32 %v298, %v299
    %v301 = vsel %vm135, %v300, 0.0
    %v302 = vadd.f32 %v283, %v301
    %s303 = sadd.s32 %s139, 1
    %s304 = sld [smem:[#allocation3 + %s303]]
    %s305 = sshra.s32 %s304, 3
    %s306 = sand.u32 %s304, 7
    %s307 = smul.u32 %s305, 8
    %s308 = scalar_lea.vmem %s2, %s307
    %v309 = vld [vmem:[%s308] sm:$0xff]
    %v310 = vstv %s306
    %vm311 = vcmp.eq.s32.totalorder %v22, %v310
    %v312 = vsel %vm311, %v309, 0.0
    %v313 = vsel %vm43, %v312, 0.0
    %v314 = vrot.slane %v313, 4
    %v315 = vadd.f32 %v313, %v314
    %v316 = vrot.slane %v315, 2
    %v317 = vadd.f32 %v315, %v316
    %v318 = vrot.slane %v317, 1
    %v319 = vadd.f32 %v317, %v318
    %v320 = vsel %vm156, %v319, 0.0
    %v321 = vadd.f32 %v302, %v320
    %s322 = sadd.s32 %s160, 1
    %s323 = sld [smem:[#allocation3 + %s322]]
    %s324 = sshra.s32 %s323, 3
    %s325 = sand.u32 %s323, 7
    %s326 = smul.u32 %s324, 8
    %s327 = scalar_lea.vmem %s2, %s326
    %v328 = vld [vmem:[%s327] sm:$0xff]
    %v329 = vstv %s325
    %vm330 = vcmp.eq.s32.totalorder %v22, %v329
    %v331 = vsel %vm330, %v328, 0.0
    %v332 = vsel %vm43, %v331, 0.0
    %v333 = vrot.slane %v332, 4
    %v334 = vadd.f32 %v332, %v333
    %v335 = vrot.slane %v334, 2
    %v336 = vadd.f32 %v334, %v335
    %v337 = vrot.slane %v336, 1
    %v338 = vadd.f32 %v336, %v337
    %v339 = vsel %vm177, %v338, 0.0
    %v340 = vadd.f32 %v321, %v339
    %s341 = sadd.s32 %s181, 1
    %s342 = sld [smem:[#allocation3 + %s341]]
    %s343 = sshra.s32 %s342, 3
    %s344 = sand.u32 %s342, 7
    %s345 = smul.u32 %s343, 8
    %s346 = scalar_lea.vmem %s2, %s345
    %v347 = vld [vmem:[%s346] sm:$0xff]
    %v348 = vstv %s344
    %vm349 = vcmp.eq.s32.totalorder %v22, %v348
    %v350 = vsel %vm349, %v347, 0.0
    %v351 = vsel %vm43, %v350, 0.0
    %v352 = vrot.slane %v351, 4
    %v353 = vadd.f32 %v351, %v352
    %v354 = vrot.slane %v353, 2
    %v355 = vadd.f32 %v353, %v354
    %v356 = vrot.slane %v355, 1
    %v357 = vadd.f32 %v355, %v356
    %v358 = vsel %vm198, %v357, 0.0
    %v359 = vadd.f32 %v340, %v358
    %360 = vset.pattern.permute.xlu0 1
    %361 = vperm.xlu0 %360, %v31
    %v362 = vpop.permute.xlu0 %361
    %v364 = vmul.f32 %v362, %v359
    %v365 = vadd.f32 %v207, %v364
    %s366 = sadd.s32 %s33, 2
    %s367 = sld [smem:[#allocation3 + %s366]]
    %s368 = sshra.s32 %s367, 3
    %s369 = sand.u32 %s367, 7
    %s370 = smul.u32 %s368, 8
    %s371 = scalar_lea.vmem %s2, %s370
    %v372 = vld [vmem:[%s371] sm:$0xff]
    %v373 = vstv %s369
    %vm374 = vcmp.eq.s32.totalorder %v22, %v373
    %v375 = vsel %vm374, %v372, 0.0
    %v376 = vsel %vm43, %v375, 0.0
    %v377 = vrot.slane %v376, 4
    %v378 = vadd.f32 %v376, %v377
    %v379 = vrot.slane %v378, 2
    %v380 = vadd.f32 %v378, %v379
    %v381 = vrot.slane %v380, 1
    %v382 = vadd.f32 %v380, %v381
    %v383 = vsel %vm51, %v382, 0.0
    %v384 = vadd.f32 %v383, 0.0
    %s385 = sadd.s32 %s55, 2
    %s386 = sld [smem:[#allocation3 + %s385]]
    %s387 = sshra.s32 %s386, 3
    %s388 = sand.u32 %s386, 7
    %s389 = smul.u32 %s387, 8
    %s390 = scalar_lea.vmem %s2, %s389
    %v391 = vld [vmem:[%s390] sm:$0xff]
    %v392 = vstv %s388
    %vm393 = vcmp.eq.s32.totalorder %v22, %v392
    %v394 = vsel %vm393, %v391, 0.0
    %v395 = vsel %vm43, %v394, 0.0
    %v396 = vrot.slane %v395, 4
    %v397 = vadd.f32 %v395, %v396
    %v398 = vrot.slane %v397, 2
    %v399 = vadd.f32 %v397, %v398
    %v400 = vrot.slane %v399, 1
    %v401 = vadd.f32 %v399, %v400
    %v402 = vsel %vm72, %v401, 0.0
    %v403 = vadd.f32 %v384, %v402
    %s404 = sadd.s32 %s76, 2
    %s405 = sld [smem:[#allocation3 + %s404]]
    %s406 = sshra.s32 %s405, 3
    %s407 = sand.u32 %s405, 7
    %s408 = smul.u32 %s406, 8
    %s409 = scalar_lea.vmem %s2, %s408
    %v410 = vld [vmem:[%s409] sm:$0xff]
    %v411 = vstv %s407
    %vm412 = vcmp.eq.s32.totalorder %v22, %v411
    %v413 = vsel %vm412, %v410, 0.0
    %v414 = vsel %vm43, %v413, 0.0
    %v415 = vrot.slane %v414, 4
    %v416 = vadd.f32 %v414, %v415
    %v417 = vrot.slane %v416, 2
    %v418 = vadd.f32 %v416, %v417
    %v419 = vrot.slane %v418, 1
    %v420 = vadd.f32 %v418, %v419
    %v421 = vsel %vm93, %v420, 0.0
    %v422 = vadd.f32 %v403, %v421
    %s423 = sadd.s32 %s97, 2
    %s424 = sld [smem:[#allocation3 + %s423]]
    %s425 = sshra.s32 %s424, 3
    %s426 = sand.u32 %s424, 7
    %s427 = smul.u32 %s425, 8
    %s428 = scalar_lea.vmem %s2, %s427
    %v429 = vld [vmem:[%s428] sm:$0xff]
    %v430 = vstv %s426
    %vm431 = vcmp.eq.s32.totalorder %v22, %v430
    %v432 = vsel %vm431, %v429, 0.0
    %v433 = vsel %vm43, %v432, 0.0
    %v434 = vrot.slane %v433, 4
    %v435 = vadd.f32 %v433, %v434
    %v436 = vrot.slane %v435, 2
    %v437 = vadd.f32 %v435, %v436
    %v438 = vrot.slane %v437, 1
    %v439 = vadd.f32 %v437, %v438
    %v440 = vsel %vm114, %v439, 0.0
    %v441 = vadd.f32 %v422, %v440
    %s442 = sadd.s32 %s118, 2
    %s443 = sld [smem:[#allocation3 + %s442]]
    %s444 = sshra.s32 %s443, 3
    %s445 = sand.u32 %s443, 7
    %s446 = smul.u32 %s444, 8
    %s447 = scalar_lea.vmem %s2, %s446
    %v448 = vld [vmem:[%s447] sm:$0xff]
    %v449 = vstv %s445
    %vm450 = vcmp.eq.s32.totalorder %v22, %v449
    %v451 = vsel %vm450, %v448, 0.0
    %v452 = vsel %vm43, %v451, 0.0
    %v453 = vrot.slane %v452, 4
    %v454 = vadd.f32 %v452, %v453
    %v455 = vrot.slane %v454, 2
    %v456 = vadd.f32 %v454, %v455
    %v457 = vrot.slane %v456, 1
    %v458 = vadd.f32 %v456, %v457
    %v459 = vsel %vm135, %v458, 0.0
    %v460 = vadd.f32 %v441, %v459
    %s461 = sadd.s32 %s139, 2
    %s462 = sld [smem:[#allocation3 + %s461]]
    %s463 = sshra.s32 %s462, 3
    %s464 = sand.u32 %s462, 7
    %s465 = smul.u32 %s463, 8
    %s466 = scalar_lea.vmem %s2, %s465
    %v467 = vld [vmem:[%s466] sm:$0xff]
    %v468 = vstv %s464
    %vm469 = vcmp.eq.s32.totalorder %v22, %v468
    %v470 = vsel %vm469, %v467, 0.0
    %v471 = vsel %vm43, %v470, 0.0
    %v472 = vrot.slane %v471, 4
    %v473 = vadd.f32 %v471, %v472
    %v474 = vrot.slane %v473, 2
    %v475 = vadd.f32 %v473, %v474
    %v476 = vrot.slane %v475, 1
    %v477 = vadd.f32 %v475, %v476
    %v478 = vsel %vm156, %v477, 0.0
    %v479 = vadd.f32 %v460, %v478
    %s480 = sadd.s32 %s160, 2
    %s481 = sld [smem:[#allocation3 + %s480]]
    %s482 = sshra.s32 %s481, 3
    %s483 = sand.u32 %s481, 7
    %s484 = smul.u32 %s482, 8
    %s485 = scalar_lea.vmem %s2, %s484
    %v486 = vld [vmem:[%s485] sm:$0xff]
    %v487 = vstv %s483
    %vm488 = vcmp.eq.s32.totalorder %v22, %v487
    %v489 = vsel %vm488, %v486, 0.0
    %v490 = vsel %vm43, %v489, 0.0
    %v491 = vrot.slane %v490, 4
    %v492 = vadd.f32 %v490, %v491
    %v493 = vrot.slane %v492, 2
    %v494 = vadd.f32 %v492, %v493
    %v495 = vrot.slane %v494, 1
    %v496 = vadd.f32 %v494, %v495
    %v497 = vsel %vm177, %v496, 0.0
    %v498 = vadd.f32 %v479, %v497
    %s499 = sadd.s32 %s181, 2
    %s500 = sld [smem:[#allocation3 + %s499]]
    %s501 = sshra.s32 %s500, 3
    %s502 = sand.u32 %s500, 7
    %s503 = smul.u32 %s501, 8
    %s504 = scalar_lea.vmem %s2, %s503
    %v505 = vld [vmem:[%s504] sm:$0xff]
    %v506 = vstv %s502
    %vm507 = vcmp.eq.s32.totalorder %v22, %v506
    %v508 = vsel %vm507, %v505, 0.0
    %v509 = vsel %vm43, %v508, 0.0
    %v510 = vrot.slane %v509, 4
    %v511 = vadd.f32 %v509, %v510
    %v512 = vrot.slane %v511, 2
    %v513 = vadd.f32 %v511, %v512
    %v514 = vrot.slane %v513, 1
    %v515 = vadd.f32 %v513, %v514
    %v516 = vsel %vm198, %v515, 0.0
    %v517 = vadd.f32 %v498, %v516
    %518 = vset.pattern.permute.xlu0 2
    %519 = vperm.xlu0 %518, %v31
    %v520 = vpop.permute.xlu0 %519
    %v522 = vmul.f32 %v520, %v517
    %v523 = vadd.f32 %v365, %v522
    %s524 = sadd.s32 %s33, 3
    %s525 = sld [smem:[#allocation3 + %s524]]
    %s526 = sshra.s32 %s525, 3
    %s527 = sand.u32 %s525, 7
    %s528 = smul.u32 %s526, 8
    %s529 = scalar_lea.vmem %s2, %s528
    %v530 = vld [vmem:[%s529] sm:$0xff]
    %v531 = vstv %s527
    %vm532 = vcmp.eq.s32.totalorder %v22, %v531
    %v533 = vsel %vm532, %v530, 0.0
    %v534 = vsel %vm43, %v533, 0.0
    %v535 = vrot.slane %v534, 4
    %v536 = vadd.f32 %v534, %v535
    %v537 = vrot.slane %v536, 2
    %v538 = vadd.f32 %v536, %v537
    %v539 = vrot.slane %v538, 1
    %v540 = vadd.f32 %v538, %v539
    %v541 = vsel %vm51, %v540, 0.0
    %v542 = vadd.f32 %v541, 0.0
    %s543 = sadd.s32 %s55, 3
    %s544 = sld [smem:[#allocation3 + %s543]]
    %s545 = sshra.s32 %s544, 3
    %s546 = sand.u32 %s544, 7
    %s547 = smul.u32 %s545, 8
    %s548 = scalar_lea.vmem %s2, %s547
    %v549 = vld [vmem:[%s548] sm:$0xff]
    %v550 = vstv %s546
    %vm551 = vcmp.eq.s32.totalorder %v22, %v550
    %v552 = vsel %vm551, %v549, 0.0
    %v553 = vsel %vm43, %v552, 0.0
    %v554 = vrot.slane %v553, 4
    %v555 = vadd.f32 %v553, %v554
    %v556 = vrot.slane %v555, 2
    %v557 = vadd.f32 %v555, %v556
    %v558 = vrot.slane %v557, 1
    %v559 = vadd.f32 %v557, %v558
    %v560 = vsel %vm72, %v559, 0.0
    %v561 = vadd.f32 %v542, %v560
    %s562 = sadd.s32 %s76, 3
    %s563 = sld [smem:[#allocation3 + %s562]]
    %s564 = sshra.s32 %s563, 3
    %s565 = sand.u32 %s563, 7
    %s566 = smul.u32 %s564, 8
    %s567 = scalar_lea.vmem %s2, %s566
    %v568 = vld [vmem:[%s567] sm:$0xff]
    %v569 = vstv %s565
    %vm570 = vcmp.eq.s32.totalorder %v22, %v569
    %v571 = vsel %vm570, %v568, 0.0
    %v572 = vsel %vm43, %v571, 0.0
    %v573 = vrot.slane %v572, 4
    %v574 = vadd.f32 %v572, %v573
    %v575 = vrot.slane %v574, 2
    %v576 = vadd.f32 %v574, %v575
    %v577 = vrot.slane %v576, 1
    %v578 = vadd.f32 %v576, %v577
    %v579 = vsel %vm93, %v578, 0.0
    %v580 = vadd.f32 %v561, %v579
    %s581 = sadd.s32 %s97, 3
    %s582 = sld [smem:[#allocation3 + %s581]]
    %s583 = sshra.s32 %s582, 3
    %s584 = sand.u32 %s582, 7
    %s585 = smul.u32 %s583, 8
    %s586 = scalar_lea.vmem %s2, %s585
    %v587 = vld [vmem:[%s586] sm:$0xff]
    %v588 = vstv %s584
    %vm589 = vcmp.eq.s32.totalorder %v22, %v588
    %v590 = vsel %vm589, %v587, 0.0
    %v591 = vsel %vm43, %v590, 0.0
    %v592 = vrot.slane %v591, 4
    %v593 = vadd.f32 %v591, %v592
    %v594 = vrot.slane %v593, 2
    %v595 = vadd.f32 %v593, %v594
    %v596 = vrot.slane %v595, 1
    %v597 = vadd.f32 %v595, %v596
    %v598 = vsel %vm114, %v597, 0.0
    %v599 = vadd.f32 %v580, %v598
    %s600 = sadd.s32 %s118, 3
    %s601 = sld [smem:[#allocation3 + %s600]]
    %s602 = sshra.s32 %s601, 3
    %s603 = sand.u32 %s601, 7
    %s604 = smul.u32 %s602, 8
    %s605 = scalar_lea.vmem %s2, %s604
    %v606 = vld [vmem:[%s605] sm:$0xff]
    %v607 = vstv %s603
    %vm608 = vcmp.eq.s32.totalorder %v22, %v607
    %v609 = vsel %vm608, %v606, 0.0
    %v610 = vsel %vm43, %v609, 0.0
    %v611 = vrot.slane %v610, 4
    %v612 = vadd.f32 %v610, %v611
    %v613 = vrot.slane %v612, 2
    %v614 = vadd.f32 %v612, %v613
    %v615 = vrot.slane %v614, 1
    %v616 = vadd.f32 %v614, %v615
    %v617 = vsel %vm135, %v616, 0.0
    %v618 = vadd.f32 %v599, %v617
    %s619 = sadd.s32 %s139, 3
    %s620 = sld [smem:[#allocation3 + %s619]]
    %s621 = sshra.s32 %s620, 3
    %s622 = sand.u32 %s620, 7
    %s623 = smul.u32 %s621, 8
    %s624 = scalar_lea.vmem %s2, %s623
    %v625 = vld [vmem:[%s624] sm:$0xff]
    %v626 = vstv %s622
    %vm627 = vcmp.eq.s32.totalorder %v22, %v626
    %v628 = vsel %vm627, %v625, 0.0
    %v629 = vsel %vm43, %v628, 0.0
    %v630 = vrot.slane %v629, 4
    %v631 = vadd.f32 %v629, %v630
    %v632 = vrot.slane %v631, 2
    %v633 = vadd.f32 %v631, %v632
    %v634 = vrot.slane %v633, 1
    %v635 = vadd.f32 %v633, %v634
    %v636 = vsel %vm156, %v635, 0.0
    %v637 = vadd.f32 %v618, %v636
    %s638 = sadd.s32 %s160, 3
    %s639 = sld [smem:[#allocation3 + %s638]]
    %s640 = sshra.s32 %s639, 3
    %s641 = sand.u32 %s639, 7
    %s642 = smul.u32 %s640, 8
    %s643 = scalar_lea.vmem %s2, %s642
    %v644 = vld [vmem:[%s643] sm:$0xff]
    %v645 = vstv %s641
    %vm646 = vcmp.eq.s32.totalorder %v22, %v645
    %v647 = vsel %vm646, %v644, 0.0
    %v648 = vsel %vm43, %v647, 0.0
    %v649 = vrot.slane %v648, 4
    %v650 = vadd.f32 %v648, %v649
    %v651 = vrot.slane %v650, 2
    %v652 = vadd.f32 %v650, %v651
    %v653 = vrot.slane %v652, 1
    %v654 = vadd.f32 %v652, %v653
    %v655 = vsel %vm177, %v654, 0.0
    %v656 = vadd.f32 %v637, %v655
    %s657 = sadd.s32 %s181, 3
    %s658 = sld [smem:[#allocation3 + %s657]]
    %s659 = sshra.s32 %s658, 3
    %s660 = sand.u32 %s658, 7
    %s661 = smul.u32 %s659, 8
    %s662 = scalar_lea.vmem %s2, %s661
    %v663 = vld [vmem:[%s662] sm:$0xff]
    %v664 = vstv %s660
    %vm665 = vcmp.eq.s32.totalorder %v22, %v664
    %v666 = vsel %vm665, %v663, 0.0
    %v667 = vsel %vm43, %v666, 0.0
    %v668 = vrot.slane %v667, 4
    %v669 = vadd.f32 %v667, %v668
    %v670 = vrot.slane %v669, 2
    %v671 = vadd.f32 %v669, %v670
    %v672 = vrot.slane %v671, 1
    %v673 = vadd.f32 %v671, %v672
    %v674 = vsel %vm198, %v673, 0.0
    %v675 = vadd.f32 %v656, %v674
    %676 = vset.pattern.permute.xlu0 3
    %677 = vperm.xlu0 %676, %v31
    %v678 = vpop.permute.xlu0 %677
    %v680 = vmul.f32 %v678, %v675
    %v681 = vadd.f32 %v523, %v680
    %s682 = scalar_lea.vmem %s3, %s29
    %683 = vst.msk [vmem:[%s682] sm:$0xff] %vm43, %v681
  $region14: #{tpu_custom_call.1} parent=0 // loop_footer
    %s28 = sadd.s32 1, %s24
  $region15: #{tpu_custom_call.1} parent=0 // loop_footer_branch
    %23 = sbr.rel target = $region11
  $region16: #{tpu_custom_call.1} parent=0 // loop_exit
    _
  // Predicated region
  $region17: #{tpu_custom_call.1} parent=0 // pred_check
    _
  $region18: #{tpu_custom_call.1} parent=0 // pred_check_branch
    %685 = sbr.rel (0) target = $region20
  $region19: #{tpu_custom_call.1} parent=0 // pred_region
    _
  $region20: #{tpu_custom_call.1} parent=0 // pred_fallthru
    _
  // Predicated region
  $region21: #{tpu_custom_call.1} parent=0 // pred_check
    _
  $region22: #{tpu_custom_call.1} parent=0 // pred_check_branch
    %687 = sbr.rel (0) target = $region24
  $region23: #{tpu_custom_call.1} parent=0 // pred_region
    _
  $region24: #{tpu_custom_call.1} parent=0 // pred_fallthru
    _

</llo_original>
